<compile_context>
chip_gen: v5e
topology: v5e:2x2
jax: 0.10.0
libtpu: 0.0.40
codegen_flags: <defaults>
</compile_context>

<pallas_src>
import jax
import jax.numpy as jnp
from jax import lax
from jax.experimental import pallas as pl
from jax.experimental.pallas import tpu as pltpu


# ----------------------------- Pallas kernel ------------------------------ #
def textcnn_kernel(tok_ref, ztab_ref, b2_ref, b3_ref, wfc2_ref, wfc3_ref,
                   bfc_ref, o_ref):
    """One batch tile: token ids -> logits, fully fused.

    tok_ref  : [S, TN]       int32  token ids (time on sublanes, batch on lanes)
    ztab_ref : [5*CP, V]     bf16/f32  embedding table folded into the 5 conv
               taps (rows [0:CP]=k2 tap0, [CP:2CP]=k2 tap1, [2CP:5CP]=k3 taps
               0..2; channel rows >= C are zero padding)
    b2_ref   : [CP, 1]       f32  conv(k=2) bias (zero padded)
    b3_ref   : [CP, 1]       f32  conv(k=3) bias (zero padded)
    wfc2_ref : [classes, CP] f32  fc1 weight columns for the k=2 features
    wfc3_ref : [classes, CP] f32  fc1 weight columns for the k=3 features
    bfc_ref  : [classes, 1]  f32  fc1 bias
    o_ref    : [classes, TN] f32  logits (transposed, batch on lanes)
    """
    S, TN = tok_ref.shape
    G5, V = ztab_ref.shape
    CP = G5 // 5

    tok = tok_ref[...]                                    # [S, TN] int32
    ztab = ztab_ref[...]                                  # [5CP, V]
    b2 = b2_ref[...]                                      # [CP, 1]
    b3 = b3_ref[...]
    iota_v = lax.broadcasted_iota(jnp.int32, (V, TN), 0)  # vocab ids on sublanes

    def tap_response(s):
        # One-hot gather fused with all five conv taps: [5CP, V] @ [V, TN].
        onehot = (iota_v == tok[s:s + 1, :]).astype(ztab.dtype)
        return jnp.dot(ztab, onehot, preferred_element_type=jnp.float32)

    # Running max-over-time of ReLU(conv): ReLU output is >= 0 so 0-init is
    # exact.  Channel-padding rows stay 0 and hit zero FC weights anyway.
    m2 = jnp.zeros((CP, TN), jnp.float32)
    m3 = jnp.zeros((CP, TN), jnp.float32)

    # Statically unrolled sliding window over time (S is small and static).
    # TODO(synk): for long sequences switch to lax.fori_loop with a small VMEM
    # window so the unrolled trace / live ranges stay bounded.
    z_m2 = None   # tap responses at time s-2
    z_m1 = None   # tap responses at time s-1
    for s in range(S):
        z_cur = tap_response(s)
        if s >= 1:   # conv k=2 output position l = s-1
            c2 = z_m1[0:CP, :] + z_cur[CP:2 * CP, :] + b2
            m2 = jnp.maximum(m2, jnp.maximum(c2, 0.0))
        if s >= 2:   # conv k=3 output position l = s-2
            c3 = (z_m2[2 * CP:3 * CP, :] + z_m1[3 * CP:4 * CP, :]
                  + z_cur[4 * CP:5 * CP, :] + b3)
            m3 = jnp.maximum(m3, jnp.maximum(c3, 0.0))
        z_m2, z_m1 = z_m1, z_cur

    # Dropout(0.5): eval-mode identity.
    # TODO(synk): training-mode stochastic dropout not implemented.

    # fc1 in the transposed layout: y.T = Wk2 @ f2.T + Wk3 @ f3.T + b.
    y = (jnp.dot(wfc2_ref[...], m2, preferred_element_type=jnp.float32)
         + jnp.dot(wfc3_ref[...], m3, preferred_element_type=jnp.float32)
         + bfc_ref[...])
    o_ref[...] = y.astype(o_ref.dtype)


# ------------------------------- wrapper ----------------------------------- #
def _round_up(x, m):
    return -(-x // m) * m


def _padded_bytes(shape, dtype):
    """VMEM footprint of one buffer after (sublane, lane) tile padding."""
    itemsize = jnp.dtype(dtype).itemsize
    dims = list(shape) if len(shape) else [1]
    dims[-1] = _round_up(dims[-1], 128)
    if len(dims) >= 2:
        sublane = 8 * max(1, 4 // itemsize)       # 8 for f32/i32, 16 for bf16
        dims[-2] = _round_up(dims[-2], sublane)
    n = 1
    for d in dims:
        n *= d
    return n * itemsize


def text_cnn_forward(tokens, emb_table, w2, b2, w3, b3, wfc, bfc, *,
                     tile_n=None, compute_dtype=jnp.bfloat16):
    """TextCNN forward (eval).  tokens [N, S] int -> logits [N, classes] f32.

    emb_table: [vocab, E] f32
    w2: [C, 2, E], b2: [C]      Conv2d(1, C, (2, E)) weights (in_channel squeezed)
    w3: [C, 3, E], b3: [C]      Conv2d(1, C, (3, E))
    wfc: [classes, 2*C], bfc: [classes]   fc1 in torch Linear layout
    """
    N, S = tokens.shape
    V, E = emb_table.shape
    C = w2.shape[0]
    classes = wfc.shape[0]
    assert S >= 3, "sequence length must cover the largest conv kernel (3)"
    assert w2.shape == (C, 2, E) and w3.shape == (C, 3, E)
    assert wfc.shape == (classes, 2 * C)

    CP = _round_up(C, 8)        # channel pad -> 8-aligned sublane slices

    # Fold the embedding table into each conv tap (exact: the conv contracts
    # the whole embedding dim).  The kernel then gathers conv responses with a
    # one-hot matmul against this small table.
    # TODO(synk): for large vocabularies replace the in-kernel one-hot gather
    # with a DMA / scalar-prefetch row gather; this path assumes the folded
    # [5*CP, vocab] table fits comfortably in VMEM.
    emb_f32 = emb_table.astype(jnp.float32)
    taps = [w2[:, 0, :], w2[:, 1, :], w3[:, 0, :], w3[:, 1, :], w3[:, 2, :]]
    groups = []
    for t in taps:
        g = emb_f32 @ t.astype(jnp.float32).T                 # [V, C]
        groups.append(jnp.pad(g, ((0, 0), (0, CP - C))))      # [V, CP]
    ztab = jnp.concatenate(groups, axis=1).T.astype(compute_dtype)   # [5CP, V]

    b2p = jnp.pad(b2.reshape(C).astype(jnp.float32), (0, CP - C)).reshape(CP, 1)
    b3p = jnp.pad(b3.reshape(C).astype(jnp.float32), (0, CP - C)).reshape(CP, 1)
    wfc2 = jnp.pad(wfc[:, 0:C].astype(jnp.float32), ((0, 0), (0, CP - C)))
    wfc3 = jnp.pad(wfc[:, C:2 * C].astype(jnp.float32), ((0, 0), (0, CP - C)))
    bfcc = bfc.reshape(classes, 1).astype(jnp.float32)

    tok_t = tokens.astype(jnp.int32).T                         # [S, N]

    # Batch tile = lane dim of every block: must be a multiple of 128 or the
    # full batch.  Prefer >= 2 blocks when the batch allows it so megacore
    # parts (v7x) can shard the "parallel" grid axis across both TensorCores.
    if tile_n is None:
        if N >= 256 and N % 128 == 0:
            tile_n = min(512, (N // 2 // 128) * 128)
        else:
            tile_n = N
    assert tile_n == N or tile_n % 128 == 0, "tile_n must be 128-aligned or == N"
    grid = (pl.cdiv(N, tile_n),)

    # Padding-aware VMEM budget: blocks are (sublane, lane)-tile padded and
    # double buffered; add the in-kernel working set (one-hot, z window, running
    # maxes) with headroom.  Cap at 64 MiB so the setting stays legal on v7x.
    block_list = [((S, tile_n), jnp.int32), (ztab.shape, compute_dtype),
                  (b2p.shape, jnp.float32), (b3p.shape, jnp.float32),
                  (wfc2.shape, jnp.float32), (wfc3.shape, jnp.float32),
                  (bfcc.shape, jnp.float32), ((classes, tile_n), jnp.float32)]
    block_bytes = sum(2 * _padded_bytes(s, d) for s, d in block_list)
    work_bytes = (2 * _padded_bytes((V, tile_n), compute_dtype)
                  + _padded_bytes((V, tile_n), jnp.int32)
                  + 4 * _padded_bytes((5 * CP, tile_n), jnp.float32)
                  + 6 * _padded_bytes((CP, tile_n), jnp.float32))
    vmem_limit = int(min(64 * 2 ** 20,
                         max(8 * 2 ** 20, 2 * (block_bytes + work_bytes))))

    def rep(shape):   # small parameters: same whole-array block every step
        return pl.BlockSpec(shape, lambda i: (0,) * len(shape))

    out_t = pl.pallas_call(
        textcnn_kernel,
        out_shape=jax.ShapeDtypeStruct((classes, N), jnp.float32),
        grid=grid,
        in_specs=[pl.BlockSpec((S, tile_n), lambda i: (0, i)),
                  rep(ztab.shape), rep(b2p.shape), rep(b3p.shape),
                  rep(wfc2.shape), rep(wfc3.shape), rep(bfcc.shape)],
        out_specs=pl.BlockSpec((classes, tile_n), lambda i: (0, i)),
        compiler_params=pltpu.CompilerParams(
            dimension_semantics=("parallel",),
            vmem_limit_bytes=vmem_limit),
    )(tok_t, ztab, b2p, b3p, wfc2, wfc3, bfcc)

    return out_t.T                                             # [N, classes]


# ----------------------------- pure-JAX reference --------------------------- #
def text_cnn_reference(tokens, emb_table, w2, b2, w3, b3, wfc, bfc):
    x = jnp.take(emb_table.astype(jnp.float32), tokens, axis=0)   # [N, S, E]
    feats = []
    for w, b, k in ((w2, b2, 2), (w3, b3, 3)):
        N, S, E = x.shape
        L = S - k + 1
        acc = jnp.zeros((N, L, w.shape[0]), jnp.float32)
        for dk in range(k):
            acc = acc + jnp.einsum("nle,ce->nlc", x[:, dk:dk + L, :],
                                   w[:, dk, :].astype(jnp.float32))
        acc = jnp.maximum(acc + b.reshape(1, 1, -1), 0.0)
        feats.append(jnp.max(acc, axis=1))
    feat = jnp.concatenate(feats, axis=1)
    return feat @ wfc.T.astype(jnp.float32) + bfc.reshape(1, -1)


if __name__ == "__main__":
    key = jax.random.PRNGKey(0)
    (k_tok, k_emb, k_w2, k_b2, k_w3, k_b3,
     k_fw, k_fb, k_tok2) = jax.random.split(key, 9)

    # Small shapes consistent with the module.
    batch, seq_len = 2, 16
    vocab, embed_dim = 50, 32
    kernel_num = 3            # C
    classes = 4

    tokens = jax.random.randint(k_tok, (batch, seq_len), 0, vocab, dtype=jnp.int32)
    emb_table = jax.random.normal(k_emb, (vocab, embed_dim), jnp.float32) * 0.1
    w2 = jax.random.normal(k_w2, (kernel_num, 2, embed_dim), jnp.float32) * 0.1
    b2 = jax.random.normal(k_b2, (kernel_num,), jnp.float32) * 0.1
    w3 = jax.random.normal(k_w3, (kernel_num, 3, embed_dim), jnp.float32) * 0.1
    b3 = jax.random.normal(k_b3, (kernel_num,), jnp.float32) * 0.1
    wfc = jax.random.normal(k_fw, (classes, 2 * kernel_num), jnp.float32) * 0.1
    bfc = jax.random.normal(k_fb, (classes,), jnp.float32) * 0.1

    y_ref = text_cnn_reference(tokens, emb_table, w2, b2, w3, b3, wfc, bfc)

    # f32 operand path: matches the unfused reference tightly.
    y_f32 = jax.block_until_ready(
        text_cnn_forward(tokens, emb_table, w2, b2, w3, b3, wfc, bfc,
                         compute_dtype=jnp.float32))
    assert y_f32.shape == (batch, classes)
    assert jnp.allclose(y_f32, y_ref, rtol=1e-4, atol=1e-4)

    # Default bf16 matmul-operand path (f32 accumulation): looser tolerance.
    y_bf16 = jax.block_until_ready(
        text_cnn_forward(tokens, emb_table, w2, b2, w3, b3, wfc, bfc))
    assert jnp.allclose(y_bf16, y_ref, rtol=5e-2, atol=5e-2)

    # Larger batch exercises the tiled multi-step "parallel" grid path
    # (two 128-lane blocks -> megacore shardable on v7x).
    big_n = 256
    tokens_big = jax.random.randint(k_tok2, (big_n, seq_len), 0, vocab,
                                    dtype=jnp.int32)
    y_big = jax.block_until_ready(
        text_cnn_forward(tokens_big, emb_table, w2, b2, w3, b3, wfc, bfc))
    y_big_ref = text_cnn_reference(tokens_big, emb_table, w2, b2, w3, b3, wfc, bfc)
    assert y_big.shape == (big_n, classes)
    assert jnp.allclose(y_big, y_big_ref, rtol=5e-2, atol=5e-2)

    print("KERNEL_OK")
</pallas_src>

<mosaic_0001>
module attributes {stable_mosaic.version = 11 : i64} {
  func.func @textcnn_kernel(%arg0: i32, %arg1: memref<16x2xi32, #tpu.memory_space<vmem>>, %arg2: memref<40x50xf32, #tpu.memory_space<vmem>>, %arg3: memref<8x1xf32, #tpu.memory_space<vmem>>, %arg4: memref<8x1xf32, #tpu.memory_space<vmem>>, %arg5: memref<4x8xf32, #tpu.memory_space<vmem>>, %arg6: memref<4x8xf32, #tpu.memory_space<vmem>>, %arg7: memref<4x1xf32, #tpu.memory_space<vmem>>, %arg8: memref<4x2xf32, #tpu.memory_space<vmem>>) attributes {dimension_semantics = [#tpu.dimension_semantics<parallel>], iteration_bounds = array<i64: 1>, scalar_prefetch = 0 : i64, scratch_operands = 0 : i64, tpu.core_type = #tpu.core_type<tc>, window_params = [{transform_indices = @transform_0, window_bounds = array<i64: 16, 2>}, {pipeline_mode = #tpu.pipeline_mode<synchronous>, transform_indices = @transform_1, window_bounds = array<i64: 40, 50>}, {pipeline_mode = #tpu.pipeline_mode<synchronous>, transform_indices = @transform_2, window_bounds = array<i64: 8, 1>}, {pipeline_mode = #tpu.pipeline_mode<synchronous>, transform_indices = @transform_3, window_bounds = array<i64: 8, 1>}, {pipeline_mode = #tpu.pipeline_mode<synchronous>, transform_indices = @transform_4, window_bounds = array<i64: 4, 8>}, {pipeline_mode = #tpu.pipeline_mode<synchronous>, transform_indices = @transform_5, window_bounds = array<i64: 4, 8>}, {pipeline_mode = #tpu.pipeline_mode<synchronous>, transform_indices = @transform_6, window_bounds = array<i64: 4, 1>}, {transform_indices = @transform_7, window_bounds = array<i64: 4, 2>}]} {
    %c0 = arith.constant 0 : index
    %c0_0 = arith.constant 0 : index
    %0 = vector.load %arg1[%c0, %c0_0] : memref<16x2xi32, #tpu.memory_space<vmem>>, vector<16x2xi32>
    %c0_1 = arith.constant 0 : index
    %c0_2 = arith.constant 0 : index
    %1 = vector.load %arg2[%c0_1, %c0_2] : memref<40x50xf32, #tpu.memory_space<vmem>>, vector<40x50xf32>
    %c0_3 = arith.constant 0 : index
    %c0_4 = arith.constant 0 : index
    %2 = vector.load %arg3[%c0_3, %c0_4] : memref<8x1xf32, #tpu.memory_space<vmem>>, vector<8x1xf32>
    %c0_5 = arith.constant 0 : index
    %c0_6 = arith.constant 0 : index
    %3 = vector.load %arg4[%c0_5, %c0_6] : memref<8x1xf32, #tpu.memory_space<vmem>>, vector<8x1xf32>
    %4 = tpu.iota {dimensions = array<i32: 0>} : vector<50x2xi32>
    %cst = arith.constant 0.000000e+00 : f32
    %5 = vector.broadcast %cst : f32 to vector<8x2xf32>
    %cst_7 = arith.constant 0.000000e+00 : f32
    %6 = vector.broadcast %cst_7 : f32 to vector<8x2xf32>
    %7 = vector.extract_strided_slice %0 {offsets = [0, 0], sizes = [1, 2], strides = [1, 1]} : vector<16x2xi32> to vector<1x2xi32>
    %8 = vector.broadcast %7 : vector<1x2xi32> to vector<50x2xi32>
    %9 = arith.cmpi eq, %4, %8 : vector<50x2xi32>
    %10 = arith.extui %9 : vector<50x2xi1> to vector<50x2xi32>
    %11 = arith.sitofp %10 : vector<50x2xi32> to vector<50x2xf32>
    %cst_8 = arith.constant dense<0.000000e+00> : vector<40x2xf32>
    %12 = tpu.matmul %1, %11, %cst_8 {dimension_numbers = #tpu.dot_dimension_numbers<[1], [0], [0], [1], [0, 0, 1, 1], [], []>} : vector<40x50xf32>, vector<50x2xf32>, vector<40x2xf32> -> vector<40x2xf32>
    %13 = vector.extract_strided_slice %0 {offsets = [1, 0], sizes = [1, 2], strides = [1, 1]} : vector<16x2xi32> to vector<1x2xi32>
    %14 = vector.broadcast %13 : vector<1x2xi32> to vector<50x2xi32>
    %15 = arith.cmpi eq, %4, %14 : vector<50x2xi32>
    %16 = arith.extui %15 : vector<50x2xi1> to vector<50x2xi32>
    %17 = arith.sitofp %16 : vector<50x2xi32> to vector<50x2xf32>
    %cst_9 = arith.constant dense<0.000000e+00> : vector<40x2xf32>
    %18 = tpu.matmul %1, %17, %cst_9 {dimension_numbers = #tpu.dot_dimension_numbers<[1], [0], [0], [1], [0, 0, 1, 1], [], []>} : vector<40x50xf32>, vector<50x2xf32>, vector<40x2xf32> -> vector<40x2xf32>
    %19 = vector.extract_strided_slice %12 {offsets = [0, 0], sizes = [8, 2], strides = [1, 1]} : vector<40x2xf32> to vector<8x2xf32>
    %20 = vector.extract_strided_slice %18 {offsets = [8, 0], sizes = [8, 2], strides = [1, 1]} : vector<40x2xf32> to vector<8x2xf32>
    %21 = arith.addf %19, %20 : vector<8x2xf32>
    %22 = vector.broadcast %2 : vector<8x1xf32> to vector<8x2xf32>
    %23 = arith.addf %21, %22 : vector<8x2xf32>
    %cst_10 = arith.constant 0.000000e+00 : f32
    %24 = vector.broadcast %cst_10 : f32 to vector<8x2xf32>
    %25 = arith.maximumf %23, %24 : vector<8x2xf32>
    %26 = arith.maximumf %5, %25 : vector<8x2xf32>
    %27 = vector.extract_strided_slice %0 {offsets = [2, 0], sizes = [1, 2], strides = [1, 1]} : vector<16x2xi32> to vector<1x2xi32>
    %28 = vector.broadcast %27 : vector<1x2xi32> to vector<50x2xi32>
    %29 = arith.cmpi eq, %4, %28 : vector<50x2xi32>
    %30 = arith.extui %29 : vector<50x2xi1> to vector<50x2xi32>
    %31 = arith.sitofp %30 : vector<50x2xi32> to vector<50x2xf32>
    %cst_11 = arith.constant dense<0.000000e+00> : vector<40x2xf32>
    %32 = tpu.matmul %1, %31, %cst_11 {dimension_numbers = #tpu.dot_dimension_numbers<[1], [0], [0], [1], [0, 0, 1, 1], [], []>} : vector<40x50xf32>, vector<50x2xf32>, vector<40x2xf32> -> vector<40x2xf32>
    %33 = vector.extract_strided_slice %18 {offsets = [0, 0], sizes = [8, 2], strides = [1, 1]} : vector<40x2xf32> to vector<8x2xf32>
    %34 = vector.extract_strided_slice %32 {offsets = [8, 0], sizes = [8, 2], strides = [1, 1]} : vector<40x2xf32> to vector<8x2xf32>
    %35 = arith.addf %33, %34 : vector<8x2xf32>
    %36 = vector.broadcast %2 : vector<8x1xf32> to vector<8x2xf32>
    %37 = arith.addf %35, %36 : vector<8x2xf32>
    %cst_12 = arith.constant 0.000000e+00 : f32
    %38 = vector.broadcast %cst_12 : f32 to vector<8x2xf32>
    %39 = arith.maximumf %37, %38 : vector<8x2xf32>
    %40 = arith.maximumf %26, %39 : vector<8x2xf32>
    %41 = vector.extract_strided_slice %12 {offsets = [16, 0], sizes = [8, 2], strides = [1, 1]} : vector<40x2xf32> to vector<8x2xf32>
    %42 = vector.extract_strided_slice %18 {offsets = [24, 0], sizes = [8, 2], strides = [1, 1]} : vector<40x2xf32> to vector<8x2xf32>
    %43 = arith.addf %41, %42 : vector<8x2xf32>
    %44 = vector.extract_strided_slice %32 {offsets = [32, 0], sizes = [8, 2], strides = [1, 1]} : vector<40x2xf32> to vector<8x2xf32>
    %45 = arith.addf %43, %44 : vector<8x2xf32>
    %46 = vector.broadcast %3 : vector<8x1xf32> to vector<8x2xf32>
    %47 = arith.addf %45, %46 : vector<8x2xf32>
    %cst_13 = arith.constant 0.000000e+00 : f32
    %48 = vector.broadcast %cst_13 : f32 to vector<8x2xf32>
    %49 = arith.maximumf %47, %48 : vector<8x2xf32>
    %50 = arith.maximumf %6, %49 : vector<8x2xf32>
    %51 = vector.extract_strided_slice %0 {offsets = [3, 0], sizes = [1, 2], strides = [1, 1]} : vector<16x2xi32> to vector<1x2xi32>
    %52 = vector.broadcast %51 : vector<1x2xi32> to vector<50x2xi32>
    %53 = arith.cmpi eq, %4, %52 : vector<50x2xi32>
    %54 = arith.extui %53 : vector<50x2xi1> to vector<50x2xi32>
    %55 = arith.sitofp %54 : vector<50x2xi32> to vector<50x2xf32>
    %cst_14 = arith.constant dense<0.000000e+00> : vector<40x2xf32>
    %56 = tpu.matmul %1, %55, %cst_14 {dimension_numbers = #tpu.dot_dimension_numbers<[1], [0], [0], [1], [0, 0, 1, 1], [], []>} : vector<40x50xf32>, vector<50x2xf32>, vector<40x2xf32> -> vector<40x2xf32>
    %57 = vector.extract_strided_slice %32 {offsets = [0, 0], sizes = [8, 2], strides = [1, 1]} : vector<40x2xf32> to vector<8x2xf32>
    %58 = vector.extract_strided_slice %56 {offsets = [8, 0], sizes = [8, 2], strides = [1, 1]} : vector<40x2xf32> to vector<8x2xf32>
    %59 = arith.addf %57, %58 : vector<8x2xf32>
    %60 = vector.broadcast %2 : vector<8x1xf32> to vector<8x2xf32>
    %61 = arith.addf %59, %60 : vector<8x2xf32>
    %cst_15 = arith.constant 0.000000e+00 : f32
    %62 = vector.broadcast %cst_15 : f32 to vector<8x2xf32>
    %63 = arith.maximumf %61, %62 : vector<8x2xf32>
    %64 = arith.maximumf %40, %63 : vector<8x2xf32>
    %65 = vector.extract_strided_slice %18 {offsets = [16, 0], sizes = [8, 2], strides = [1, 1]} : vector<40x2xf32> to vector<8x2xf32>
    %66 = vector.extract_strided_slice %32 {offsets = [24, 0], sizes = [8, 2], strides = [1, 1]} : vector<40x2xf32> to vector<8x2xf32>
    %67 = arith.addf %65, %66 : vector<8x2xf32>
    %68 = vector.extract_strided_slice %56 {offsets = [32, 0], sizes = [8, 2], strides = [1, 1]} : vector<40x2xf32> to vector<8x2xf32>
    %69 = arith.addf %67, %68 : vector<8x2xf32>
    %70 = vector.broadcast %3 : vector<8x1xf32> to vector<8x2xf32>
    %71 = arith.addf %69, %70 : vector<8x2xf32>
    %cst_16 = arith.constant 0.000000e+00 : f32
    %72 = vector.broadcast %cst_16 : f32 to vector<8x2xf32>
    %73 = arith.maximumf %71, %72 : vector<8x2xf32>
    %74 = arith.maximumf %50, %73 : vector<8x2xf32>
    %75 = vector.extract_strided_slice %0 {offsets = [4, 0], sizes = [1, 2], strides = [1, 1]} : vector<16x2xi32> to vector<1x2xi32>
    %76 = vector.broadcast %75 : vector<1x2xi32> to vector<50x2xi32>
    %77 = arith.cmpi eq, %4, %76 : vector<50x2xi32>
    %78 = arith.extui %77 : vector<50x2xi1> to vector<50x2xi32>
    %79 = arith.sitofp %78 : vector<50x2xi32> to vector<50x2xf32>
    %cst_17 = arith.constant dense<0.000000e+00> : vector<40x2xf32>
    %80 = tpu.matmul %1, %79, %cst_17 {dimension_numbers = #tpu.dot_dimension_numbers<[1], [0], [0], [1], [0, 0, 1, 1], [], []>} : vector<40x50xf32>, vector<50x2xf32>, vector<40x2xf32> -> vector<40x2xf32>
    %81 = vector.extract_strided_slice %56 {offsets = [0, 0], sizes = [8, 2], strides = [1, 1]} : vector<40x2xf32> to vector<8x2xf32>
    %82 = vector.extract_strided_slice %80 {offsets = [8, 0], sizes = [8, 2], strides = [1, 1]} : vector<40x2xf32> to vector<8x2xf32>
    %83 = arith.addf %81, %82 : vector<8x2xf32>
    %84 = vector.broadcast %2 : vector<8x1xf32> to vector<8x2xf32>
    %85 = arith.addf %83, %84 : vector<8x2xf32>
    %cst_18 = arith.constant 0.000000e+00 : f32
    %86 = vector.broadcast %cst_18 : f32 to vector<8x2xf32>
    %87 = arith.maximumf %85, %86 : vector<8x2xf32>
    %88 = arith.maximumf %64, %87 : vector<8x2xf32>
    %89 = vector.extract_strided_slice %32 {offsets = [16, 0], sizes = [8, 2], strides = [1, 1]} : vector<40x2xf32> to vector<8x2xf32>
    %90 = vector.extract_strided_slice %56 {offsets = [24, 0], sizes = [8, 2], strides = [1, 1]} : vector<40x2xf32> to vector<8x2xf32>
    %91 = arith.addf %89, %90 : vector<8x2xf32>
    %92 = vector.extract_strided_slice %80 {offsets = [32, 0], sizes = [8, 2], strides = [1, 1]} : vector<40x2xf32> to vector<8x2xf32>
    %93 = arith.addf %91, %92 : vector<8x2xf32>
    %94 = vector.broadcast %3 : vector<8x1xf32> to vector<8x2xf32>
    %95 = arith.addf %93, %94 : vector<8x2xf32>
    %cst_19 = arith.constant 0.000000e+00 : f32
    %96 = vector.broadcast %cst_19 : f32 to vector<8x2xf32>
    %97 = arith.maximumf %95, %96 : vector<8x2xf32>
    %98 = arith.maximumf %74, %97 : vector<8x2xf32>
    %99 = vector.extract_strided_slice %0 {offsets = [5, 0], sizes = [1, 2], strides = [1, 1]} : vector<16x2xi32> to vector<1x2xi32>
    %100 = vector.broadcast %99 : vector<1x2xi32> to vector<50x2xi32>
    %101 = arith.cmpi eq, %4, %100 : vector<50x2xi32>
    %102 = arith.extui %101 : vector<50x2xi1> to vector<50x2xi32>
    %103 = arith.sitofp %102 : vector<50x2xi32> to vector<50x2xf32>
    %cst_20 = arith.constant dense<0.000000e+00> : vector<40x2xf32>
    %104 = tpu.matmul %1, %103, %cst_20 {dimension_numbers = #tpu.dot_dimension_numbers<[1], [0], [0], [1], [0, 0, 1, 1], [], []>} : vector<40x50xf32>, vector<50x2xf32>, vector<40x2xf32> -> vector<40x2xf32>
    %105 = vector.extract_strided_slice %80 {offsets = [0, 0], sizes = [8, 2], strides = [1, 1]} : vector<40x2xf32> to vector<8x2xf32>
    %106 = vector.extract_strided_slice %104 {offsets = [8, 0], sizes = [8, 2], strides = [1, 1]} : vector<40x2xf32> to vector<8x2xf32>
    %107 = arith.addf %105, %106 : vector<8x2xf32>
    %108 = vector.broadcast %2 : vector<8x1xf32> to vector<8x2xf32>
    %109 = arith.addf %107, %108 : vector<8x2xf32>
    %cst_21 = arith.constant 0.000000e+00 : f32
    %110 = vector.broadcast %cst_21 : f32 to vector<8x2xf32>
    %111 = arith.maximumf %109, %110 : vector<8x2xf32>
    %112 = arith.maximumf %88, %111 : vector<8x2xf32>
    %113 = vector.extract_strided_slice %56 {offsets = [16, 0], sizes = [8, 2], strides = [1, 1]} : vector<40x2xf32> to vector<8x2xf32>
    %114 = vector.extract_strided_slice %80 {offsets = [24, 0], sizes = [8, 2], strides = [1, 1]} : vector<40x2xf32> to vector<8x2xf32>
    %115 = arith.addf %113, %114 : vector<8x2xf32>
    %116 = vector.extract_strided_slice %104 {offsets = [32, 0], sizes = [8, 2], strides = [1, 1]} : vector<40x2xf32> to vector<8x2xf32>
    %117 = arith.addf %115, %116 : vector<8x2xf32>
    %118 = vector.broadcast %3 : vector<8x1xf32> to vector<8x2xf32>
    %119 = arith.addf %117, %118 : vector<8x2xf32>
    %cst_22 = arith.constant 0.000000e+00 : f32
    %120 = vector.broadcast %cst_22 : f32 to vector<8x2xf32>
    %121 = arith.maximumf %119, %120 : vector<8x2xf32>
    %122 = arith.maximumf %98, %121 : vector<8x2xf32>
    %123 = vector.extract_strided_slice %0 {offsets = [6, 0], sizes = [1, 2], strides = [1, 1]} : vector<16x2xi32> to vector<1x2xi32>
    %124 = vector.broadcast %123 : vector<1x2xi32> to vector<50x2xi32>
    %125 = arith.cmpi eq, %4, %124 : vector<50x2xi32>
    %126 = arith.extui %125 : vector<50x2xi1> to vector<50x2xi32>
    %127 = arith.sitofp %126 : vector<50x2xi32> to vector<50x2xf32>
    %cst_23 = arith.constant dense<0.000000e+00> : vector<40x2xf32>
    %128 = tpu.matmul %1, %127, %cst_23 {dimension_numbers = #tpu.dot_dimension_numbers<[1], [0], [0], [1], [0, 0, 1, 1], [], []>} : vector<40x50xf32>, vector<50x2xf32>, vector<40x2xf32> -> vector<40x2xf32>
    %129 = vector.extract_strided_slice %104 {offsets = [0, 0], sizes = [8, 2], strides = [1, 1]} : vector<40x2xf32> to vector<8x2xf32>
    %130 = vector.extract_strided_slice %128 {offsets = [8, 0], sizes = [8, 2], strides = [1, 1]} : vector<40x2xf32> to vector<8x2xf32>
    %131 = arith.addf %129, %130 : vector<8x2xf32>
    %132 = vector.broadcast %2 : vector<8x1xf32> to vector<8x2xf32>
    %133 = arith.addf %131, %132 : vector<8x2xf32>
    %cst_24 = arith.constant 0.000000e+00 : f32
    %134 = vector.broadcast %cst_24 : f32 to vector<8x2xf32>
    %135 = arith.maximumf %133, %134 : vector<8x2xf32>
    %136 = arith.maximumf %112, %135 : vector<8x2xf32>
    %137 = vector.extract_strided_slice %80 {offsets = [16, 0], sizes = [8, 2], strides = [1, 1]} : vector<40x2xf32> to vector<8x2xf32>
    %138 = vector.extract_strided_slice %104 {offsets = [24, 0], sizes = [8, 2], strides = [1, 1]} : vector<40x2xf32> to vector<8x2xf32>
    %139 = arith.addf %137, %138 : vector<8x2xf32>
    %140 = vector.extract_strided_slice %128 {offsets = [32, 0], sizes = [8, 2], strides = [1, 1]} : vector<40x2xf32> to vector<8x2xf32>
    %141 = arith.addf %139, %140 : vector<8x2xf32>
    %142 = vector.broadcast %3 : vector<8x1xf32> to vector<8x2xf32>
    %143 = arith.addf %141, %142 : vector<8x2xf32>
    %cst_25 = arith.constant 0.000000e+00 : f32
    %144 = vector.broadcast %cst_25 : f32 to vector<8x2xf32>
    %145 = arith.maximumf %143, %144 : vector<8x2xf32>
    %146 = arith.maximumf %122, %145 : vector<8x2xf32>
    %147 = vector.extract_strided_slice %0 {offsets = [7, 0], sizes = [1, 2], strides = [1, 1]} : vector<16x2xi32> to vector<1x2xi32>
    %148 = vector.broadcast %147 : vector<1x2xi32> to vector<50x2xi32>
    %149 = arith.cmpi eq, %4, %148 : vector<50x2xi32>
    %150 = arith.extui %149 : vector<50x2xi1> to vector<50x2xi32>
    %151 = arith.sitofp %150 : vector<50x2xi32> to vector<50x2xf32>
    %cst_26 = arith.constant dense<0.000000e+00> : vector<40x2xf32>
    %152 = tpu.matmul %1, %151, %cst_26 {dimension_numbers = #tpu.dot_dimension_numbers<[1], [0], [0], [1], [0, 0, 1, 1], [], []>} : vector<40x50xf32>, vector<50x2xf32>, vector<40x2xf32> -> vector<40x2xf32>
    %153 = vector.extract_strided_slice %128 {offsets = [0, 0], sizes = [8, 2], strides = [1, 1]} : vector<40x2xf32> to vector<8x2xf32>
    %154 = vector.extract_strided_slice %152 {offsets = [8, 0], sizes = [8, 2], strides = [1, 1]} : vector<40x2xf32> to vector<8x2xf32>
    %155 = arith.addf %153, %154 : vector<8x2xf32>
    %156 = vector.broadcast %2 : vector<8x1xf32> to vector<8x2xf32>
    %157 = arith.addf %155, %156 : vector<8x2xf32>
    %cst_27 = arith.constant 0.000000e+00 : f32
    %158 = vector.broadcast %cst_27 : f32 to vector<8x2xf32>
    %159 = arith.maximumf %157, %158 : vector<8x2xf32>
    %160 = arith.maximumf %136, %159 : vector<8x2xf32>
    %161 = vector.extract_strided_slice %104 {offsets = [16, 0], sizes = [8, 2], strides = [1, 1]} : vector<40x2xf32> to vector<8x2xf32>
    %162 = vector.extract_strided_slice %128 {offsets = [24, 0], sizes = [8, 2], strides = [1, 1]} : vector<40x2xf32> to vector<8x2xf32>
    %163 = arith.addf %161, %162 : vector<8x2xf32>
    %164 = vector.extract_strided_slice %152 {offsets = [32, 0], sizes = [8, 2], strides = [1, 1]} : vector<40x2xf32> to vector<8x2xf32>
    %165 = arith.addf %163, %164 : vector<8x2xf32>
    %166 = vector.broadcast %3 : vector<8x1xf32> to vector<8x2xf32>
    %167 = arith.addf %165, %166 : vector<8x2xf32>
    %cst_28 = arith.constant 0.000000e+00 : f32
    %168 = vector.broadcast %cst_28 : f32 to vector<8x2xf32>
    %169 = arith.maximumf %167, %168 : vector<8x2xf32>
    %170 = arith.maximumf %146, %169 : vector<8x2xf32>
    %171 = vector.extract_strided_slice %0 {offsets = [8, 0], sizes = [1, 2], strides = [1, 1]} : vector<16x2xi32> to vector<1x2xi32>
    %172 = vector.broadcast %171 : vector<1x2xi32> to vector<50x2xi32>
    %173 = arith.cmpi eq, %4, %172 : vector<50x2xi32>
    %174 = arith.extui %173 : vector<50x2xi1> to vector<50x2xi32>
    %175 = arith.sitofp %174 : vector<50x2xi32> to vector<50x2xf32>
    %cst_29 = arith.constant dense<0.000000e+00> : vector<40x2xf32>
    %176 = tpu.matmul %1, %175, %cst_29 {dimension_numbers = #tpu.dot_dimension_numbers<[1], [0], [0], [1], [0, 0, 1, 1], [], []>} : vector<40x50xf32>, vector<50x2xf32>, vector<40x2xf32> -> vector<40x2xf32>
    %177 = vector.extract_strided_slice %152 {offsets = [0, 0], sizes = [8, 2], strides = [1, 1]} : vector<40x2xf32> to vector<8x2xf32>
    %178 = vector.extract_strided_slice %176 {offsets = [8, 0], sizes = [8, 2], strides = [1, 1]} : vector<40x2xf32> to vector<8x2xf32>
    %179 = arith.addf %177, %178 : vector<8x2xf32>
    %180 = vector.broadcast %2 : vector<8x1xf32> to vector<8x2xf32>
    %181 = arith.addf %179, %180 : vector<8x2xf32>
    %cst_30 = arith.constant 0.000000e+00 : f32
    %182 = vector.broadcast %cst_30 : f32 to vector<8x2xf32>
    %183 = arith.maximumf %181, %182 : vector<8x2xf32>
    %184 = arith.maximumf %160, %183 : vector<8x2xf32>
    %185 = vector.extract_strided_slice %128 {offsets = [16, 0], sizes = [8, 2], strides = [1, 1]} : vector<40x2xf32> to vector<8x2xf32>
    %186 = vector.extract_strided_slice %152 {offsets = [24, 0], sizes = [8, 2], strides = [1, 1]} : vector<40x2xf32> to vector<8x2xf32>
    %187 = arith.addf %185, %186 : vector<8x2xf32>
    %188 = vector.extract_strided_slice %176 {offsets = [32, 0], sizes = [8, 2], strides = [1, 1]} : vector<40x2xf32> to vector<8x2xf32>
    %189 = arith.addf %187, %188 : vector<8x2xf32>
    %190 = vector.broadcast %3 : vector<8x1xf32> to vector<8x2xf32>
    %191 = arith.addf %189, %190 : vector<8x2xf32>
    %cst_31 = arith.constant 0.000000e+00 : f32
    %192 = vector.broadcast %cst_31 : f32 to vector<8x2xf32>
    %193 = arith.maximumf %191, %192 : vector<8x2xf32>
    %194 = arith.maximumf %170, %193 : vector<8x2xf32>
    %195 = vector.extract_strided_slice %0 {offsets = [9, 0], sizes = [1, 2], strides = [1, 1]} : vector<16x2xi32> to vector<1x2xi32>
    %196 = vector.broadcast %195 : vector<1x2xi32> to vector<50x2xi32>
    %197 = arith.cmpi eq, %4, %196 : vector<50x2xi32>
    %198 = arith.extui %197 : vector<50x2xi1> to vector<50x2xi32>
    %199 = arith.sitofp %198 : vector<50x2xi32> to vector<50x2xf32>
    %cst_32 = arith.constant dense<0.000000e+00> : vector<40x2xf32>
    %200 = tpu.matmul %1, %199, %cst_32 {dimension_numbers = #tpu.dot_dimension_numbers<[1], [0], [0], [1], [0, 0, 1, 1], [], []>} : vector<40x50xf32>, vector<50x2xf32>, vector<40x2xf32> -> vector<40x2xf32>
    %201 = vector.extract_strided_slice %176 {offsets = [0, 0], sizes = [8, 2], strides = [1, 1]} : vector<40x2xf32> to vector<8x2xf32>
    %202 = vector.extract_strided_slice %200 {offsets = [8, 0], sizes = [8, 2], strides = [1, 1]} : vector<40x2xf32> to vector<8x2xf32>
    %203 = arith.addf %201, %202 : vector<8x2xf32>
    %204 = vector.broadcast %2 : vector<8x1xf32> to vector<8x2xf32>
    %205 = arith.addf %203, %204 : vector<8x2xf32>
    %cst_33 = arith.constant 0.000000e+00 : f32
    %206 = vector.broadcast %cst_33 : f32 to vector<8x2xf32>
    %207 = arith.maximumf %205, %206 : vector<8x2xf32>
    %208 = arith.maximumf %184, %207 : vector<8x2xf32>
    %209 = vector.extract_strided_slice %152 {offsets = [16, 0], sizes = [8, 2], strides = [1, 1]} : vector<40x2xf32> to vector<8x2xf32>
    %210 = vector.extract_strided_slice %176 {offsets = [24, 0], sizes = [8, 2], strides = [1, 1]} : vector<40x2xf32> to vector<8x2xf32>
    %211 = arith.addf %209, %210 : vector<8x2xf32>
    %212 = vector.extract_strided_slice %200 {offsets = [32, 0], sizes = [8, 2], strides = [1, 1]} : vector<40x2xf32> to vector<8x2xf32>
    %213 = arith.addf %211, %212 : vector<8x2xf32>
    %214 = vector.broadcast %3 : vector<8x1xf32> to vector<8x2xf32>
    %215 = arith.addf %213, %214 : vector<8x2xf32>
    %cst_34 = arith.constant 0.000000e+00 : f32
    %216 = vector.broadcast %cst_34 : f32 to vector<8x2xf32>
    %217 = arith.maximumf %215, %216 : vector<8x2xf32>
    %218 = arith.maximumf %194, %217 : vector<8x2xf32>
    %219 = vector.extract_strided_slice %0 {offsets = [10, 0], sizes = [1, 2], strides = [1, 1]} : vector<16x2xi32> to vector<1x2xi32>
    %220 = vector.broadcast %219 : vector<1x2xi32> to vector<50x2xi32>
    %221 = arith.cmpi eq, %4, %220 : vector<50x2xi32>
    %222 = arith.extui %221 : vector<50x2xi1> to vector<50x2xi32>
    %223 = arith.sitofp %222 : vector<50x2xi32> to vector<50x2xf32>
    %cst_35 = arith.constant dense<0.000000e+00> : vector<40x2xf32>
    %224 = tpu.matmul %1, %223, %cst_35 {dimension_numbers = #tpu.dot_dimension_numbers<[1], [0], [0], [1], [0, 0, 1, 1], [], []>} : vector<40x50xf32>, vector<50x2xf32>, vector<40x2xf32> -> vector<40x2xf32>
    %225 = vector.extract_strided_slice %200 {offsets = [0, 0], sizes = [8, 2], strides = [1, 1]} : vector<40x2xf32> to vector<8x2xf32>
    %226 = vector.extract_strided_slice %224 {offsets = [8, 0], sizes = [8, 2], strides = [1, 1]} : vector<40x2xf32> to vector<8x2xf32>
    %227 = arith.addf %225, %226 : vector<8x2xf32>
    %228 = vector.broadcast %2 : vector<8x1xf32> to vector<8x2xf32>
    %229 = arith.addf %227, %228 : vector<8x2xf32>
    %cst_36 = arith.constant 0.000000e+00 : f32
    %230 = vector.broadcast %cst_36 : f32 to vector<8x2xf32>
    %231 = arith.maximumf %229, %230 : vector<8x2xf32>
    %232 = arith.maximumf %208, %231 : vector<8x2xf32>
    %233 = vector.extract_strided_slice %176 {offsets = [16, 0], sizes = [8, 2], strides = [1, 1]} : vector<40x2xf32> to vector<8x2xf32>
    %234 = vector.extract_strided_slice %200 {offsets = [24, 0], sizes = [8, 2], strides = [1, 1]} : vector<40x2xf32> to vector<8x2xf32>
    %235 = arith.addf %233, %234 : vector<8x2xf32>
    %236 = vector.extract_strided_slice %224 {offsets = [32, 0], sizes = [8, 2], strides = [1, 1]} : vector<40x2xf32> to vector<8x2xf32>
    %237 = arith.addf %235, %236 : vector<8x2xf32>
    %238 = vector.broadcast %3 : vector<8x1xf32> to vector<8x2xf32>
    %239 = arith.addf %237, %238 : vector<8x2xf32>
    %cst_37 = arith.constant 0.000000e+00 : f32
    %240 = vector.broadcast %cst_37 : f32 to vector<8x2xf32>
    %241 = arith.maximumf %239, %240 : vector<8x2xf32>
    %242 = arith.maximumf %218, %241 : vector<8x2xf32>
    %243 = vector.extract_strided_slice %0 {offsets = [11, 0], sizes = [1, 2], strides = [1, 1]} : vector<16x2xi32> to vector<1x2xi32>
    %244 = vector.broadcast %243 : vector<1x2xi32> to vector<50x2xi32>
    %245 = arith.cmpi eq, %4, %244 : vector<50x2xi32>
    %246 = arith.extui %245 : vector<50x2xi1> to vector<50x2xi32>
    %247 = arith.sitofp %246 : vector<50x2xi32> to vector<50x2xf32>
    %cst_38 = arith.constant dense<0.000000e+00> : vector<40x2xf32>
    %248 = tpu.matmul %1, %247, %cst_38 {dimension_numbers = #tpu.dot_dimension_numbers<[1], [0], [0], [1], [0, 0, 1, 1], [], []>} : vector<40x50xf32>, vector<50x2xf32>, vector<40x2xf32> -> vector<40x2xf32>
    %249 = vector.extract_strided_slice %224 {offsets = [0, 0], sizes = [8, 2], strides = [1, 1]} : vector<40x2xf32> to vector<8x2xf32>
    %250 = vector.extract_strided_slice %248 {offsets = [8, 0], sizes = [8, 2], strides = [1, 1]} : vector<40x2xf32> to vector<8x2xf32>
    %251 = arith.addf %249, %250 : vector<8x2xf32>
    %252 = vector.broadcast %2 : vector<8x1xf32> to vector<8x2xf32>
    %253 = arith.addf %251, %252 : vector<8x2xf32>
    %cst_39 = arith.constant 0.000000e+00 : f32
    %254 = vector.broadcast %cst_39 : f32 to vector<8x2xf32>
    %255 = arith.maximumf %253, %254 : vector<8x2xf32>
    %256 = arith.maximumf %232, %255 : vector<8x2xf32>
    %257 = vector.extract_strided_slice %200 {offsets = [16, 0], sizes = [8, 2], strides = [1, 1]} : vector<40x2xf32> to vector<8x2xf32>
    %258 = vector.extract_strided_slice %224 {offsets = [24, 0], sizes = [8, 2], strides = [1, 1]} : vector<40x2xf32> to vector<8x2xf32>
    %259 = arith.addf %257, %258 : vector<8x2xf32>
    %260 = vector.extract_strided_slice %248 {offsets = [32, 0], sizes = [8, 2], strides = [1, 1]} : vector<40x2xf32> to vector<8x2xf32>
    %261 = arith.addf %259, %260 : vector<8x2xf32>
    %262 = vector.broadcast %3 : vector<8x1xf32> to vector<8x2xf32>
    %263 = arith.addf %261, %262 : vector<8x2xf32>
    %cst_40 = arith.constant 0.000000e+00 : f32
    %264 = vector.broadcast %cst_40 : f32 to vector<8x2xf32>
    %265 = arith.maximumf %263, %264 : vector<8x2xf32>
    %266 = arith.maximumf %242, %265 : vector<8x2xf32>
    %267 = vector.extract_strided_slice %0 {offsets = [12, 0], sizes = [1, 2], strides = [1, 1]} : vector<16x2xi32> to vector<1x2xi32>
    %268 = vector.broadcast %267 : vector<1x2xi32> to vector<50x2xi32>
    %269 = arith.cmpi eq, %4, %268 : vector<50x2xi32>
    %270 = arith.extui %269 : vector<50x2xi1> to vector<50x2xi32>
    %271 = arith.sitofp %270 : vector<50x2xi32> to vector<50x2xf32>
    %cst_41 = arith.constant dense<0.000000e+00> : vector<40x2xf32>
    %272 = tpu.matmul %1, %271, %cst_41 {dimension_numbers = #tpu.dot_dimension_numbers<[1], [0], [0], [1], [0, 0, 1, 1], [], []>} : vector<40x50xf32>, vector<50x2xf32>, vector<40x2xf32> -> vector<40x2xf32>
    %273 = vector.extract_strided_slice %248 {offsets = [0, 0], sizes = [8, 2], strides = [1, 1]} : vector<40x2xf32> to vector<8x2xf32>
    %274 = vector.extract_strided_slice %272 {offsets = [8, 0], sizes = [8, 2], strides = [1, 1]} : vector<40x2xf32> to vector<8x2xf32>
    %275 = arith.addf %273, %274 : vector<8x2xf32>
    %276 = vector.broadcast %2 : vector<8x1xf32> to vector<8x2xf32>
    %277 = arith.addf %275, %276 : vector<8x2xf32>
    %cst_42 = arith.constant 0.000000e+00 : f32
    %278 = vector.broadcast %cst_42 : f32 to vector<8x2xf32>
    %279 = arith.maximumf %277, %278 : vector<8x2xf32>
    %280 = arith.maximumf %256, %279 : vector<8x2xf32>
    %281 = vector.extract_strided_slice %224 {offsets = [16, 0], sizes = [8, 2], strides = [1, 1]} : vector<40x2xf32> to vector<8x2xf32>
    %282 = vector.extract_strided_slice %248 {offsets = [24, 0], sizes = [8, 2], strides = [1, 1]} : vector<40x2xf32> to vector<8x2xf32>
    %283 = arith.addf %281, %282 : vector<8x2xf32>
    %284 = vector.extract_strided_slice %272 {offsets = [32, 0], sizes = [8, 2], strides = [1, 1]} : vector<40x2xf32> to vector<8x2xf32>
    %285 = arith.addf %283, %284 : vector<8x2xf32>
    %286 = vector.broadcast %3 : vector<8x1xf32> to vector<8x2xf32>
    %287 = arith.addf %285, %286 : vector<8x2xf32>
    %cst_43 = arith.constant 0.000000e+00 : f32
    %288 = vector.broadcast %cst_43 : f32 to vector<8x2xf32>
    %289 = arith.maximumf %287, %288 : vector<8x2xf32>
    %290 = arith.maximumf %266, %289 : vector<8x2xf32>
    %291 = vector.extract_strided_slice %0 {offsets = [13, 0], sizes = [1, 2], strides = [1, 1]} : vector<16x2xi32> to vector<1x2xi32>
    %292 = vector.broadcast %291 : vector<1x2xi32> to vector<50x2xi32>
    %293 = arith.cmpi eq, %4, %292 : vector<50x2xi32>
    %294 = arith.extui %293 : vector<50x2xi1> to vector<50x2xi32>
    %295 = arith.sitofp %294 : vector<50x2xi32> to vector<50x2xf32>
    %cst_44 = arith.constant dense<0.000000e+00> : vector<40x2xf32>
    %296 = tpu.matmul %1, %295, %cst_44 {dimension_numbers = #tpu.dot_dimension_numbers<[1], [0], [0], [1], [0, 0, 1, 1], [], []>} : vector<40x50xf32>, vector<50x2xf32>, vector<40x2xf32> -> vector<40x2xf32>
    %297 = vector.extract_strided_slice %272 {offsets = [0, 0], sizes = [8, 2], strides = [1, 1]} : vector<40x2xf32> to vector<8x2xf32>
    %298 = vector.extract_strided_slice %296 {offsets = [8, 0], sizes = [8, 2], strides = [1, 1]} : vector<40x2xf32> to vector<8x2xf32>
    %299 = arith.addf %297, %298 : vector<8x2xf32>
    %300 = vector.broadcast %2 : vector<8x1xf32> to vector<8x2xf32>
    %301 = arith.addf %299, %300 : vector<8x2xf32>
    %cst_45 = arith.constant 0.000000e+00 : f32
    %302 = vector.broadcast %cst_45 : f32 to vector<8x2xf32>
    %303 = arith.maximumf %301, %302 : vector<8x2xf32>
    %304 = arith.maximumf %280, %303 : vector<8x2xf32>
    %305 = vector.extract_strided_slice %248 {offsets = [16, 0], sizes = [8, 2], strides = [1, 1]} : vector<40x2xf32> to vector<8x2xf32>
    %306 = vector.extract_strided_slice %272 {offsets = [24, 0], sizes = [8, 2], strides = [1, 1]} : vector<40x2xf32> to vector<8x2xf32>
    %307 = arith.addf %305, %306 : vector<8x2xf32>
    %308 = vector.extract_strided_slice %296 {offsets = [32, 0], sizes = [8, 2], strides = [1, 1]} : vector<40x2xf32> to vector<8x2xf32>
    %309 = arith.addf %307, %308 : vector<8x2xf32>
    %310 = vector.broadcast %3 : vector<8x1xf32> to vector<8x2xf32>
    %311 = arith.addf %309, %310 : vector<8x2xf32>
    %cst_46 = arith.constant 0.000000e+00 : f32
    %312 = vector.broadcast %cst_46 : f32 to vector<8x2xf32>
    %313 = arith.maximumf %311, %312 : vector<8x2xf32>
    %314 = arith.maximumf %290, %313 : vector<8x2xf32>
    %315 = vector.extract_strided_slice %0 {offsets = [14, 0], sizes = [1, 2], strides = [1, 1]} : vector<16x2xi32> to vector<1x2xi32>
    %316 = vector.broadcast %315 : vector<1x2xi32> to vector<50x2xi32>
    %317 = arith.cmpi eq, %4, %316 : vector<50x2xi32>
    %318 = arith.extui %317 : vector<50x2xi1> to vector<50x2xi32>
    %319 = arith.sitofp %318 : vector<50x2xi32> to vector<50x2xf32>
    %cst_47 = arith.constant dense<0.000000e+00> : vector<40x2xf32>
    %320 = tpu.matmul %1, %319, %cst_47 {dimension_numbers = #tpu.dot_dimension_numbers<[1], [0], [0], [1], [0, 0, 1, 1], [], []>} : vector<40x50xf32>, vector<50x2xf32>, vector<40x2xf32> -> vector<40x2xf32>
    %321 = vector.extract_strided_slice %296 {offsets = [0, 0], sizes = [8, 2], strides = [1, 1]} : vector<40x2xf32> to vector<8x2xf32>
    %322 = vector.extract_strided_slice %320 {offsets = [8, 0], sizes = [8, 2], strides = [1, 1]} : vector<40x2xf32> to vector<8x2xf32>
    %323 = arith.addf %321, %322 : vector<8x2xf32>
    %324 = vector.broadcast %2 : vector<8x1xf32> to vector<8x2xf32>
    %325 = arith.addf %323, %324 : vector<8x2xf32>
    %cst_48 = arith.constant 0.000000e+00 : f32
    %326 = vector.broadcast %cst_48 : f32 to vector<8x2xf32>
    %327 = arith.maximumf %325, %326 : vector<8x2xf32>
    %328 = arith.maximumf %304, %327 : vector<8x2xf32>
    %329 = vector.extract_strided_slice %272 {offsets = [16, 0], sizes = [8, 2], strides = [1, 1]} : vector<40x2xf32> to vector<8x2xf32>
    %330 = vector.extract_strided_slice %296 {offsets = [24, 0], sizes = [8, 2], strides = [1, 1]} : vector<40x2xf32> to vector<8x2xf32>
    %331 = arith.addf %329, %330 : vector<8x2xf32>
    %332 = vector.extract_strided_slice %320 {offsets = [32, 0], sizes = [8, 2], strides = [1, 1]} : vector<40x2xf32> to vector<8x2xf32>
    %333 = arith.addf %331, %332 : vector<8x2xf32>
    %334 = vector.broadcast %3 : vector<8x1xf32> to vector<8x2xf32>
    %335 = arith.addf %333, %334 : vector<8x2xf32>
    %cst_49 = arith.constant 0.000000e+00 : f32
    %336 = vector.broadcast %cst_49 : f32 to vector<8x2xf32>
    %337 = arith.maximumf %335, %336 : vector<8x2xf32>
    %338 = arith.maximumf %314, %337 : vector<8x2xf32>
    %339 = vector.extract_strided_slice %0 {offsets = [15, 0], sizes = [1, 2], strides = [1, 1]} : vector<16x2xi32> to vector<1x2xi32>
    %340 = vector.broadcast %339 : vector<1x2xi32> to vector<50x2xi32>
    %341 = arith.cmpi eq, %4, %340 : vector<50x2xi32>
    %342 = arith.extui %341 : vector<50x2xi1> to vector<50x2xi32>
    %343 = arith.sitofp %342 : vector<50x2xi32> to vector<50x2xf32>
    %cst_50 = arith.constant dense<0.000000e+00> : vector<40x2xf32>
    %344 = tpu.matmul %1, %343, %cst_50 {dimension_numbers = #tpu.dot_dimension_numbers<[1], [0], [0], [1], [0, 0, 1, 1], [], []>} : vector<40x50xf32>, vector<50x2xf32>, vector<40x2xf32> -> vector<40x2xf32>
    %345 = vector.extract_strided_slice %320 {offsets = [0, 0], sizes = [8, 2], strides = [1, 1]} : vector<40x2xf32> to vector<8x2xf32>
    %346 = vector.extract_strided_slice %344 {offsets = [8, 0], sizes = [8, 2], strides = [1, 1]} : vector<40x2xf32> to vector<8x2xf32>
    %347 = arith.addf %345, %346 : vector<8x2xf32>
    %348 = vector.broadcast %2 : vector<8x1xf32> to vector<8x2xf32>
    %349 = arith.addf %347, %348 : vector<8x2xf32>
    %cst_51 = arith.constant 0.000000e+00 : f32
    %350 = vector.broadcast %cst_51 : f32 to vector<8x2xf32>
    %351 = arith.maximumf %349, %350 : vector<8x2xf32>
    %352 = arith.maximumf %328, %351 : vector<8x2xf32>
    %353 = vector.extract_strided_slice %296 {offsets = [16, 0], sizes = [8, 2], strides = [1, 1]} : vector<40x2xf32> to vector<8x2xf32>
    %354 = vector.extract_strided_slice %320 {offsets = [24, 0], sizes = [8, 2], strides = [1, 1]} : vector<40x2xf32> to vector<8x2xf32>
    %355 = arith.addf %353, %354 : vector<8x2xf32>
    %356 = vector.extract_strided_slice %344 {offsets = [32, 0], sizes = [8, 2], strides = [1, 1]} : vector<40x2xf32> to vector<8x2xf32>
    %357 = arith.addf %355, %356 : vector<8x2xf32>
    %358 = vector.broadcast %3 : vector<8x1xf32> to vector<8x2xf32>
    %359 = arith.addf %357, %358 : vector<8x2xf32>
    %cst_52 = arith.constant 0.000000e+00 : f32
    %360 = vector.broadcast %cst_52 : f32 to vector<8x2xf32>
    %361 = arith.maximumf %359, %360 : vector<8x2xf32>
    %362 = arith.maximumf %338, %361 : vector<8x2xf32>
    %c0_53 = arith.constant 0 : index
    %c0_54 = arith.constant 0 : index
    %363 = vector.load %arg5[%c0_53, %c0_54] : memref<4x8xf32, #tpu.memory_space<vmem>>, vector<4x8xf32>
    %cst_55 = arith.constant dense<0.000000e+00> : vector<4x2xf32>
    %364 = tpu.matmul %363, %352, %cst_55 {dimension_numbers = #tpu.dot_dimension_numbers<[1], [0], [0], [1], [0, 0, 1, 1], [], []>} : vector<4x8xf32>, vector<8x2xf32>, vector<4x2xf32> -> vector<4x2xf32>
    %c0_56 = arith.constant 0 : index
    %c0_57 = arith.constant 0 : index
    %365 = vector.load %arg6[%c0_56, %c0_57] : memref<4x8xf32, #tpu.memory_space<vmem>>, vector<4x8xf32>
    %cst_58 = arith.constant dense<0.000000e+00> : vector<4x2xf32>
    %366 = tpu.matmul %365, %362, %cst_58 {dimension_numbers = #tpu.dot_dimension_numbers<[1], [0], [0], [1], [0, 0, 1, 1], [], []>} : vector<4x8xf32>, vector<8x2xf32>, vector<4x2xf32> -> vector<4x2xf32>
    %367 = arith.addf %364, %366 : vector<4x2xf32>
    %c0_59 = arith.constant 0 : index
    %c0_60 = arith.constant 0 : index
    %368 = vector.load %arg7[%c0_59, %c0_60] : memref<4x1xf32, #tpu.memory_space<vmem>>, vector<4x1xf32>
    %369 = vector.broadcast %368 : vector<4x1xf32> to vector<4x2xf32>
    %370 = arith.addf %367, %369 : vector<4x2xf32>
    %c0_61 = arith.constant 0 : index
    %c0_62 = arith.constant 0 : index
    %371 = vector.load %arg8[%c0_61, %c0_62] : memref<4x2xf32, #tpu.memory_space<vmem>>, vector<4x2xf32>
    tpu.vector_store %arg8[%c0_61, %c0_62], %370 {strides = array<i32>} : memref<4x2xf32, #tpu.memory_space<vmem>>, vector<4x2xf32>,
    return
  }
  func.func @transform_0(%arg0: i32) -> (i32, i32) {
    %c0_i32 = arith.constant 0 : i32
    %c0_i32_0 = arith.constant 0 : i32
    return %c0_i32, %arg0 : i32, i32
  }
  func.func @transform_1(%arg0: i32) -> (i32, i32) {
    %c0_i32 = arith.constant 0 : i32
    %c0_i32_0 = arith.constant 0 : i32
    %c0_i32_1 = arith.constant 0 : i32
    return %c0_i32, %c0_i32_0 : i32, i32
  }
  func.func @transform_2(%arg0: i32) -> (i32, i32) {
    %c0_i32 = arith.constant 0 : i32
    %c0_i32_0 = arith.constant 0 : i32
    %c0_i32_1 = arith.constant 0 : i32
    return %c0_i32, %c0_i32_0 : i32, i32
  }
  func.func @transform_3(%arg0: i32) -> (i32, i32) {
    %c0_i32 = arith.constant 0 : i32
    %c0_i32_0 = arith.constant 0 : i32
    %c0_i32_1 = arith.constant 0 : i32
    return %c0_i32, %c0_i32_0 : i32, i32
  }
  func.func @transform_4(%arg0: i32) -> (i32, i32) {
    %c0_i32 = arith.constant 0 : i32
    %c0_i32_0 = arith.constant 0 : i32
    %c0_i32_1 = arith.constant 0 : i32
    return %c0_i32, %c0_i32_0 : i32, i32
  }
  func.func @transform_5(%arg0: i32) -> (i32, i32) {
    %c0_i32 = arith.constant 0 : i32
    %c0_i32_0 = arith.constant 0 : i32
    %c0_i32_1 = arith.constant 0 : i32
    return %c0_i32, %c0_i32_0 : i32, i32
  }
  func.func @transform_6(%arg0: i32) -> (i32, i32) {
    %c0_i32 = arith.constant 0 : i32
    %c0_i32_0 = arith.constant 0 : i32
    %c0_i32_1 = arith.constant 0 : i32
    return %c0_i32, %c0_i32_0 : i32, i32
  }
  func.func @transform_7(%arg0: i32) -> (i32, i32) {
    %c0_i32 = arith.constant 0 : i32
    %c0_i32_0 = arith.constant 0 : i32
    return %c0_i32, %arg0 : i32, i32
  }
}

</mosaic_0001>

<llo_original>
// kernel: tpu_custom_call.1
$region0: #{tpu_custom_call.1}
  #allocation0 [shape = 'u32[]', space=smem, size = 0x4, offset = 0x4, fixed_abs, tag = 'smem constant byte address 0x4 - core index']
  #allocation1 [shape = 'u32[72,128]{1,0:T(1,128)}', space=vmem, size = 0x9000, scoped, tag = 'internal scratch']
  %s0 = inlined_call_operand.vmem [shape: s32[16,2], index: 0, kind: input, shape index: {}]
  %s1 = inlined_call_operand.hbm [shape: f32[40,50], index: 1, kind: input, shape index: {}]
  %s2 = inlined_call_operand.vmem [shape: f32[8,1], index: 2, kind: input, shape index: {}]
  %s3 = inlined_call_operand.vmem [shape: f32[8,1], index: 3, kind: input, shape index: {}]
  %s4 = inlined_call_operand.vmem [shape: f32[4,8], index: 4, kind: input, shape index: {}]
  %s5 = inlined_call_operand.vmem [shape: f32[4,8], index: 5, kind: input, shape index: {}]
  %s6 = inlined_call_operand.vmem [shape: f32[4,1], index: 6, kind: input, shape index: {}]
  %s7 = inlined_call_operand.vmem [shape: f32[4,2], index: 7, kind: output, shape index: {}]
  %s8 = sld [smem:[#allocation0]]
  $region42: #{tpu_custom_call.1} parent=0
    _
  %s10 = ssub.s32 1, %s8
  %s11 = scalar_select 0, %s10, %s8
  $region1: #{tpu_custom_call.1} parent=0
    #allocation2 [shape = 'u8[20480]{0}', space=vmem, size = 0x5000, scoped, tag = 'input window, operand 1, single buffered']
    #allocation3 [shape = 's32[1]{0}', space=sflag, size = 0x4, scoped, tag = 'scoped memory for tpu_custom_call.1']
    %12 = vsyncpa [#allocation3], 0
    // Predicated region
    $region2: #{tpu_custom_call.1} parent=1 // pred_check
      _
    $region3: #{tpu_custom_call.1} parent=1 // pred_check_branch
      %14 = sbr.rel (0) target = $region5
    $region4: #{tpu_custom_call.1} parent=1 // pred_region
      _
    $region5: #{tpu_custom_call.1} parent=1 // pred_fallthru
      _
    // Predicated region
    $region6: #{tpu_custom_call.1} parent=1 // pred_check
      _
    $region7: #{tpu_custom_call.1} parent=1 // pred_check_branch
      %16 = sbr.rel (0) target = $region9
    $region8: #{tpu_custom_call.1} parent=1 // pred_region
      %18 = vsyncadd [#allocation3], 0
      %s19 = sshll.u32 %s1, 4
      %s20 = int_to_ptr.hbm [resolvable:$true] %s19
      %s21 = sshll.u32 [#allocation2], 4
      %s22 = int_to_ptr.vmem [resolvable:$true] %s21
      %27 = dma.hbm_to_vmem [thread:$0]  %s20, 640, %s22, [#allocation3], 128, 128, 8
    $region9: #{tpu_custom_call.1} parent=1 // pred_fallthru
      _
    // Predicated region
    $region10: #{tpu_custom_call.1} parent=1 // pred_check
      _
    $region11: #{tpu_custom_call.1} parent=1 // pred_check_branch
      %29 = sbr.rel (0) target = $region13
    $region12: #{tpu_custom_call.1} parent=1 // pred_region
      _
    $region13: #{tpu_custom_call.1} parent=1 // pred_fallthru
      _
    // Predicated region
    $region14: #{tpu_custom_call.1} parent=1 // pred_check
      _
    $region15: #{tpu_custom_call.1} parent=1 // pred_check_branch
      %31 = sbr.rel (0) target = $region17
    $region16: #{tpu_custom_call.1} parent=1 // pred_region
      _
    $region17: #{tpu_custom_call.1} parent=1 // pred_fallthru
      _
    // Predicated region
    $region18: #{tpu_custom_call.1} parent=1 // pred_check
      _
    $region19: #{tpu_custom_call.1} parent=1 // pred_check_branch
      %33 = sbr.rel (0) target = $region21
    $region20: #{tpu_custom_call.1} parent=1 // pred_region
      _
    $region21: #{tpu_custom_call.1} parent=1 // pred_fallthru
      _
    // Predicated region
    $region22: #{tpu_custom_call.1} parent=1 // pred_check
      _
    $region23: #{tpu_custom_call.1} parent=1 // pred_check_branch
      %35 = sbr.rel (0) target = $region25
    $region24: #{tpu_custom_call.1} parent=1 // pred_region
      _
    $region25: #{tpu_custom_call.1} parent=1 // pred_fallthru
      _
    // Predicated region
    $region26: #{tpu_custom_call.1} parent=1 // pred_check
      _
    $region27: #{tpu_custom_call.1} parent=1 // pred_check_branch
      %37 = sbr.rel (0) target = $region29
    $region28: #{tpu_custom_call.1} parent=1 // pred_region
      _
    $region29: #{tpu_custom_call.1} parent=1 // pred_fallthru
      _
    // Predicated region
    $region30: #{tpu_custom_call.1} parent=1 // pred_check
      _
    $region31: #{tpu_custom_call.1} parent=1 // pred_check_branch
      %39 = sbr.rel (0) target = $region33
    $region32: #{tpu_custom_call.1} parent=1 // pred_region
      %41 = dma.done [#allocation3], 640
    $region33: #{tpu_custom_call.1} parent=1 // pred_fallthru
      _
    %v42 = vld [vmem:[%s0] sm:$0xff]
    %v43 = vld [vmem:[%s0 + $0x8] sm:$0xff]
    %v44 = vld [vmem:[#allocation2] sm:$0xff]
    %v45 = vld [vmem:[#allocation2 + $0x8] sm:$0xff]
    %v46 = vld [vmem:[#allocation2 + $0x10] sm:$0xff]
    %v47 = vld [vmem:[#allocation2 + $0x18] sm:$0xff]
    %v48 = vld [vmem:[#allocation2 + $0x20] sm:$0xff]
    %v49 = vld [vmem:[%s2] sm:$0xff]
    %v50 = vld [vmem:[%s3] sm:$0xff]
    %v51 = vlaneseq
    %v52 = vshrl.u32 %v51, 7
    %v53 = vadd.s32 %v52, 8
    %v54 = vadd.s32 %v52, 16
    %v55 = vadd.s32 %v52, 24
    %v56 = vadd.s32 %v52, 32
    %v57 = vadd.s32 %v52, 40
    %v58 = vadd.s32 %v52, 48
    %v59 = vperm.slane %v42, 0
    %vm60 = vcmp.eq.s32.totalorder %v52, %v59
    %vm61 = vcmp.eq.s32.totalorder %v53, %v59
    %vm62 = vcmp.eq.s32.totalorder %v54, %v59
    %vm63 = vcmp.eq.s32.totalorder %v55, %v59
    %vm64 = vcmp.eq.s32.totalorder %v56, %v59
    %vm65 = vcmp.eq.s32.totalorder %v57, %v59
    %vm66 = vcmp.eq.s32.totalorder %v58, %v59
    %v67 = vsel %vm60, 1, 0
    %v68 = vsel %vm61, 1, 0
    %v69 = vsel %vm62, 1, 0
    %v70 = vsel %vm63, 1, 0
    %v71 = vsel %vm64, 1, 0
    %v72 = vsel %vm65, 1, 0
    %v73 = vsel %vm66, 1, 0
    %v74 = vcvt.s32.f32 %v67
    %v75 = vcvt.s32.f32 %v68
    %v76 = vcvt.s32.f32 %v69
    %v77 = vcvt.s32.f32 %v70
    %v78 = vcvt.s32.f32 %v71
    %v79 = vcvt.s32.f32 %v72
    %v80 = vcvt.s32.f32 %v73
    %vm81 = vcmask 408576
    %v83 = vsel %vm81, %v44, 0
    %v86 = vsel %vm81, %v45, 0
    %v89 = vsel %vm81, %v46, 0
    %v92 = vsel %vm81, %v47, 0
    %v95 = vsel %vm81, %v48, 0
    %vm97 = vcmask 1041408
    %v99 = vsel %vm97, %v80, 0
    %101 = vmatpush.msra.mxu0 0.0
    %102 = vmatpush.msra.mxu0 0.0
    %103 = vmatpush.msra.mxu0 0.0
    %104 = vmatpush.msra.mxu0 0.0
    %105 = vmatpush.msra.mxu0 0.0
    %106 = vmatpush.msra.mxu0 0.0
    %107 = vmatpush.msra.mxu0 0.0
    %108 = vmatpush.msra.mxu0 0.0
    %109 = vmatpush.msra.mxu0 0.0
    %110 = vmatpush.msra.mxu0 %v99
    %111 = vmatpush.msra.mxu0 %v79
    %112 = vmatpush.msra.mxu0 %v78
    %113 = vmatpush.msra.mxu0 %v77
    %114 = vmatpush.msra.mxu0 %v76
    %115 = vmatpush.msra.mxu0 %v75
    %116 = vmatpush.msra.mxu0 %v74
    %117 = vmatmul.f32.gmra.mxu0 %v83
    %v118 = vpop.f32.mrf.mxu0
    %v119 = vadd.f32 0.0, %v118
    %120 = vmatmul.f32.gmra.mxu0 %v86
    %v121 = vpop.f32.mrf.mxu0
    %122 = vmatmul.f32.gmra.mxu0 %v89
    %v123 = vpop.f32.mrf.mxu0
    %v124 = vadd.f32 0.0, %v123
    %125 = vmatmul.f32.gmra.mxu0 %v92
    %v126 = vpop.f32.mrf.mxu0
    %127 = vmatmul.f32.gmra.mxu0 %v95
    %v128 = vpop.f32.mrf.mxu0
    %129 = vdwg.mxu0
    %v130 = vperm.slane %v42, 1
    %vm131 = vcmp.eq.s32.totalorder %v52, %v130
    %vm132 = vcmp.eq.s32.totalorder %v53, %v130
    %vm133 = vcmp.eq.s32.totalorder %v54, %v130
    %vm134 = vcmp.eq.s32.totalorder %v55, %v130
    %vm135 = vcmp.eq.s32.totalorder %v56, %v130
    %vm136 = vcmp.eq.s32.totalorder %v57, %v130
    %vm137 = vcmp.eq.s32.totalorder %v58, %v130
    %v138 = vsel %vm131, 1, 0
    %v139 = vsel %vm132, 1, 0
    %v140 = vsel %vm133, 1, 0
    %v141 = vsel %vm134, 1, 0
    %v142 = vsel %vm135, 1, 0
    %v143 = vsel %vm136, 1, 0
    %v144 = vsel %vm137, 1, 0
    %v145 = vcvt.s32.f32 %v138
    %v146 = vcvt.s32.f32 %v139
    %v147 = vcvt.s32.f32 %v140
    %v148 = vcvt.s32.f32 %v141
    %v149 = vcvt.s32.f32 %v142
    %v150 = vcvt.s32.f32 %v143
    %v151 = vcvt.s32.f32 %v144
    %v153 = vsel %vm97, %v151, 0
    %155 = vmatpush.msra.mxu0 0.0
    %156 = vmatpush.msra.mxu0 0.0
    %157 = vmatpush.msra.mxu0 0.0
    %158 = vmatpush.msra.mxu0 0.0
    %159 = vmatpush.msra.mxu0 0.0
    %160 = vmatpush.msra.mxu0 0.0
    %161 = vmatpush.msra.mxu0 0.0
    %162 = vmatpush.msra.mxu0 0.0
    %163 = vmatpush.msra.mxu0 0.0
    %164 = vmatpush.msra.mxu0 %v153
    %165 = vmatpush.msra.mxu0 %v150
    %166 = vmatpush.msra.mxu0 %v149
    %167 = vmatpush.msra.mxu0 %v148
    %168 = vmatpush.msra.mxu0 %v147
    %169 = vmatpush.msra.mxu0 %v146
    %170 = vmatpush.msra.mxu0 %v145
    %171 = vmatmul.f32.gmra.mxu0 %v83
    %v172 = vpop.f32.mrf.mxu0
    %v173 = vadd.f32 0.0, %v172
    %174 = vmatmul.f32.gmra.mxu0 %v86
    %v175 = vpop.f32.mrf.mxu0
    %v176 = vadd.f32 0.0, %v175
    %177 = vmatmul.f32.gmra.mxu0 %v89
    %v178 = vpop.f32.mrf.mxu0
    %v179 = vadd.f32 0.0, %v178
    %180 = vmatmul.f32.gmra.mxu0 %v92
    %v181 = vpop.f32.mrf.mxu0
    %v182 = vadd.f32 0.0, %v181
    %183 = vmatmul.f32.gmra.mxu0 %v95
    %v184 = vpop.f32.mrf.mxu0
    %185 = vdwg.mxu0
    %v186 = vadd.f32 %v119, %v176
    %188 = vset.pattern.permute.xlu0 0
    %189 = vperm.xlu0 %188, %v49
    %v190 = vpop.permute.xlu0 %189
    %v192 = vadd.f32 %v186, %v190
    %v193 = vmax.f32 %v192, 0.0
    %v194 = vmax.f32 %v193, 0.0
    %v195 = vperm.slane %v42, 2
    %vm196 = vcmp.eq.s32.totalorder %v52, %v195
    %vm197 = vcmp.eq.s32.totalorder %v53, %v195
    %vm198 = vcmp.eq.s32.totalorder %v54, %v195
    %vm199 = vcmp.eq.s32.totalorder %v55, %v195
    %vm200 = vcmp.eq.s32.totalorder %v56, %v195
    %vm201 = vcmp.eq.s32.totalorder %v57, %v195
    %vm202 = vcmp.eq.s32.totalorder %v58, %v195
    %v203 = vsel %vm196, 1, 0
    %v204 = vsel %vm197, 1, 0
    %v205 = vsel %vm198, 1, 0
    %v206 = vsel %vm199, 1, 0
    %v207 = vsel %vm200, 1, 0
    %v208 = vsel %vm201, 1, 0
    %v209 = vsel %vm202, 1, 0
    %v210 = vcvt.s32.f32 %v203
    %v211 = vcvt.s32.f32 %v204
    %v212 = vcvt.s32.f32 %v205
    %v213 = vcvt.s32.f32 %v206
    %v214 = vcvt.s32.f32 %v207
    %v215 = vcvt.s32.f32 %v208
    %v216 = vcvt.s32.f32 %v209
    %v218 = vsel %vm97, %v216, 0
    %220 = vmatpush.msra.mxu0 0.0
    %221 = vmatpush.msra.mxu0 0.0
    %222 = vmatpush.msra.mxu0 0.0
    %223 = vmatpush.msra.mxu0 0.0
    %224 = vmatpush.msra.mxu0 0.0
    %225 = vmatpush.msra.mxu0 0.0
    %226 = vmatpush.msra.mxu0 0.0
    %227 = vmatpush.msra.mxu0 0.0
    %228 = vmatpush.msra.mxu0 0.0
    %229 = vmatpush.msra.mxu0 %v218
    %230 = vmatpush.msra.mxu0 %v215
    %231 = vmatpush.msra.mxu0 %v214
    %232 = vmatpush.msra.mxu0 %v213
    %233 = vmatpush.msra.mxu0 %v212
    %234 = vmatpush.msra.mxu0 %v211
    %235 = vmatpush.msra.mxu0 %v210
    %236 = vmatmul.f32.gmra.mxu0 %v83
    %v237 = vpop.f32.mrf.mxu0
    %v238 = vadd.f32 0.0, %v237
    %239 = vmatmul.f32.gmra.mxu0 %v86
    %v240 = vpop.f32.mrf.mxu0
    %v241 = vadd.f32 0.0, %v240
    %242 = vmatmul.f32.gmra.mxu0 %v89
    %v243 = vpop.f32.mrf.mxu0
    %v244 = vadd.f32 0.0, %v243
    %245 = vmatmul.f32.gmra.mxu0 %v92
    %v246 = vpop.f32.mrf.mxu0
    %v247 = vadd.f32 0.0, %v246
    %248 = vmatmul.f32.gmra.mxu0 %v95
    %v249 = vpop.f32.mrf.mxu0
    %v250 = vadd.f32 0.0, %v249
    %251 = vdwg.mxu0
    %v252 = vadd.f32 %v173, %v241
    %v253 = vadd.f32 %v252, %v190
    %v254 = vmax.f32 %v253, 0.0
    %v255 = vmax.f32 %v194, %v254
    %v256 = vadd.f32 %v124, %v182
    %v257 = vadd.f32 %v256, %v250
    %259 = vset.pattern.permute.xlu0 0
    %260 = vperm.xlu0 %259, %v50
    %v261 = vpop.permute.xlu0 %260
    %v263 = vadd.f32 %v257, %v261
    %v264 = vmax.f32 %v263, 0.0
    %v265 = vmax.f32 %v264, 0.0
    %v266 = vperm.slane %v42, 3
    %vm267 = vcmp.eq.s32.totalorder %v52, %v266
    %vm268 = vcmp.eq.s32.totalorder %v53, %v266
    %vm269 = vcmp.eq.s32.totalorder %v54, %v266
    %vm270 = vcmp.eq.s32.totalorder %v55, %v266
    %vm271 = vcmp.eq.s32.totalorder %v56, %v266
    %vm272 = vcmp.eq.s32.totalorder %v57, %v266
    %vm273 = vcmp.eq.s32.totalorder %v58, %v266
    %v274 = vsel %vm267, 1, 0
    %v275 = vsel %vm268, 1, 0
    %v276 = vsel %vm269, 1, 0
    %v277 = vsel %vm270, 1, 0
    %v278 = vsel %vm271, 1, 0
    %v279 = vsel %vm272, 1, 0
    %v280 = vsel %vm273, 1, 0
    %v281 = vcvt.s32.f32 %v274
    %v282 = vcvt.s32.f32 %v275
    %v283 = vcvt.s32.f32 %v276
    %v284 = vcvt.s32.f32 %v277
    %v285 = vcvt.s32.f32 %v278
    %v286 = vcvt.s32.f32 %v279
    %v287 = vcvt.s32.f32 %v280
    %v289 = vsel %vm97, %v287, 0
    %291 = vmatpush.msra.mxu0 0.0
    %292 = vmatpush.msra.mxu0 0.0
    %293 = vmatpush.msra.mxu0 0.0
    %294 = vmatpush.msra.mxu0 0.0
    %295 = vmatpush.msra.mxu0 0.0
    %296 = vmatpush.msra.mxu0 0.0
    %297 = vmatpush.msra.mxu0 0.0
    %298 = vmatpush.msra.mxu0 0.0
    %299 = vmatpush.msra.mxu0 0.0
    %300 = vmatpush.msra.mxu0 %v289
    %301 = vmatpush.msra.mxu0 %v286
    %302 = vmatpush.msra.mxu0 %v285
    %303 = vmatpush.msra.mxu0 %v284
    %304 = vmatpush.msra.mxu0 %v283
    %305 = vmatpush.msra.mxu0 %v282
    %306 = vmatpush.msra.mxu0 %v281
    %307 = vmatmul.f32.gmra.mxu0 %v83
    %v308 = vpop.f32.mrf.mxu0
    %v309 = vadd.f32 0.0, %v308
    %310 = vmatmul.f32.gmra.mxu0 %v86
    %v311 = vpop.f32.mrf.mxu0
    %v312 = vadd.f32 0.0, %v311
    %313 = vmatmul.f32.gmra.mxu0 %v89
    %v314 = vpop.f32.mrf.mxu0
    %v315 = vadd.f32 0.0, %v314
    %316 = vmatmul.f32.gmra.mxu0 %v92
    %v317 = vpop.f32.mrf.mxu0
    %v318 = vadd.f32 0.0, %v317
    %319 = vmatmul.f32.gmra.mxu0 %v95
    %v320 = vpop.f32.mrf.mxu0
    %v321 = vadd.f32 0.0, %v320
    %322 = vdwg.mxu0
    %v323 = vadd.f32 %v238, %v312
    %v324 = vadd.f32 %v323, %v190
    %v325 = vmax.f32 %v324, 0.0
    %v326 = vmax.f32 %v255, %v325
    %v327 = vadd.f32 %v179, %v247
    %v328 = vadd.f32 %v327, %v321
    %v329 = vadd.f32 %v328, %v261
    %v330 = vmax.f32 %v329, 0.0
    %v331 = vmax.f32 %v265, %v330
    %v332 = vperm.slane %v42, 4
    %vm333 = vcmp.eq.s32.totalorder %v52, %v332
    %vm334 = vcmp.eq.s32.totalorder %v53, %v332
    %vm335 = vcmp.eq.s32.totalorder %v54, %v332
    %vm336 = vcmp.eq.s32.totalorder %v55, %v332
    %vm337 = vcmp.eq.s32.totalorder %v56, %v332
    %vm338 = vcmp.eq.s32.totalorder %v57, %v332
    %vm339 = vcmp.eq.s32.totalorder %v58, %v332
    %v340 = vsel %vm333, 1, 0
    %v341 = vsel %vm334, 1, 0
    %v342 = vsel %vm335, 1, 0
    %v343 = vsel %vm336, 1, 0
    %v344 = vsel %vm337, 1, 0
    %v345 = vsel %vm338, 1, 0
    %v346 = vsel %vm339, 1, 0
    %v347 = vcvt.s32.f32 %v340
    %v348 = vcvt.s32.f32 %v341
    %v349 = vcvt.s32.f32 %v342
    %v350 = vcvt.s32.f32 %v343
    %v351 = vcvt.s32.f32 %v344
    %v352 = vcvt.s32.f32 %v345
    %v353 = vcvt.s32.f32 %v346
    %v355 = vsel %vm97, %v353, 0
    %357 = vmatpush.msra.mxu0 0.0
    %358 = vmatpush.msra.mxu0 0.0
    %359 = vmatpush.msra.mxu0 0.0
    %360 = vmatpush.msra.mxu0 0.0
    %361 = vmatpush.msra.mxu0 0.0
    %362 = vmatpush.msra.mxu0 0.0
    %363 = vmatpush.msra.mxu0 0.0
    %364 = vmatpush.msra.mxu0 0.0
    %365 = vmatpush.msra.mxu0 0.0
    %366 = vmatpush.msra.mxu0 %v355
    %367 = vmatpush.msra.mxu0 %v352
    %368 = vmatpush.msra.mxu0 %v351
    %369 = vmatpush.msra.mxu0 %v350
    %370 = vmatpush.msra.mxu0 %v349
    %371 = vmatpush.msra.mxu0 %v348
    %372 = vmatpush.msra.mxu0 %v347
    %373 = vmatmul.f32.gmra.mxu0 %v83
    %v374 = vpop.f32.mrf.mxu0
    %v375 = vadd.f32 0.0, %v374
    %376 = vmatmul.f32.gmra.mxu0 %v86
    %v377 = vpop.f32.mrf.mxu0
    %v378 = vadd.f32 0.0, %v377
    %379 = vmatmul.f32.gmra.mxu0 %v89
    %v380 = vpop.f32.mrf.mxu0
    %v381 = vadd.f32 0.0, %v380
    %382 = vmatmul.f32.gmra.mxu0 %v92
    %v383 = vpop.f32.mrf.mxu0
    %v384 = vadd.f32 0.0, %v383
    %385 = vmatmul.f32.gmra.mxu0 %v95
    %v386 = vpop.f32.mrf.mxu0
    %v387 = vadd.f32 0.0, %v386
    %388 = vdwg.mxu0
    %v389 = vadd.f32 %v309, %v378
    %v390 = vadd.f32 %v389, %v190
    %v391 = vmax.f32 %v390, 0.0
    %v392 = vmax.f32 %v326, %v391
    %v393 = vadd.f32 %v244, %v318
    %v394 = vadd.f32 %v393, %v387
    %v395 = vadd.f32 %v394, %v261
    %v396 = vmax.f32 %v395, 0.0
    %v397 = vmax.f32 %v331, %v396
    %v398 = vperm.slane %v42, 5
    %vm399 = vcmp.eq.s32.totalorder %v52, %v398
    %vm400 = vcmp.eq.s32.totalorder %v53, %v398
    %vm401 = vcmp.eq.s32.totalorder %v54, %v398
    %vm402 = vcmp.eq.s32.totalorder %v55, %v398
    %vm403 = vcmp.eq.s32.totalorder %v56, %v398
    %vm404 = vcmp.eq.s32.totalorder %v57, %v398
    %vm405 = vcmp.eq.s32.totalorder %v58, %v398
    %v406 = vsel %vm399, 1, 0
    %v407 = vsel %vm400, 1, 0
    %v408 = vsel %vm401, 1, 0
    %v409 = vsel %vm402, 1, 0
    %v410 = vsel %vm403, 1, 0
    %v411 = vsel %vm404, 1, 0
    %v412 = vsel %vm405, 1, 0
    %v413 = vcvt.s32.f32 %v406
    %v414 = vcvt.s32.f32 %v407
    %v415 = vcvt.s32.f32 %v408
    %v416 = vcvt.s32.f32 %v409
    %v417 = vcvt.s32.f32 %v410
    %v418 = vcvt.s32.f32 %v411
    %v419 = vcvt.s32.f32 %v412
    %v421 = vsel %vm97, %v419, 0
    %423 = vmatpush.msra.mxu0 0.0
    %424 = vmatpush.msra.mxu0 0.0
    %425 = vmatpush.msra.mxu0 0.0
    %426 = vmatpush.msra.mxu0 0.0
    %427 = vmatpush.msra.mxu0 0.0
    %428 = vmatpush.msra.mxu0 0.0
    %429 = vmatpush.msra.mxu0 0.0
    %430 = vmatpush.msra.mxu0 0.0
    %431 = vmatpush.msra.mxu0 0.0
    %432 = vmatpush.msra.mxu0 %v421
    %433 = vmatpush.msra.mxu0 %v418
    %434 = vmatpush.msra.mxu0 %v417
    %435 = vmatpush.msra.mxu0 %v416
    %436 = vmatpush.msra.mxu0 %v415
    %437 = vmatpush.msra.mxu0 %v414
    %438 = vmatpush.msra.mxu0 %v413
    %439 = vmatmul.f32.gmra.mxu0 %v83
    %v440 = vpop.f32.mrf.mxu0
    %v441 = vadd.f32 0.0, %v440
    %442 = vmatmul.f32.gmra.mxu0 %v86
    %v443 = vpop.f32.mrf.mxu0
    %v444 = vadd.f32 0.0, %v443
    %445 = vmatmul.f32.gmra.mxu0 %v89
    %v446 = vpop.f32.mrf.mxu0
    %v447 = vadd.f32 0.0, %v446
    %448 = vmatmul.f32.gmra.mxu0 %v92
    %v449 = vpop.f32.mrf.mxu0
    %v450 = vadd.f32 0.0, %v449
    %451 = vmatmul.f32.gmra.mxu0 %v95
    %v452 = vpop.f32.mrf.mxu0
    %v453 = vadd.f32 0.0, %v452
    %454 = vdwg.mxu0
    %v455 = vadd.f32 %v375, %v444
    %v456 = vadd.f32 %v455, %v190
    %v457 = vmax.f32 %v456, 0.0
    %v458 = vmax.f32 %v392, %v457
    %v459 = vadd.f32 %v315, %v384
    %v460 = vadd.f32 %v459, %v453
    %v461 = vadd.f32 %v460, %v261
    %v462 = vmax.f32 %v461, 0.0
    %v463 = vmax.f32 %v397, %v462
    %v464 = vperm.slane %v42, 6
    %vm465 = vcmp.eq.s32.totalorder %v52, %v464
    %vm466 = vcmp.eq.s32.totalorder %v53, %v464
    %vm467 = vcmp.eq.s32.totalorder %v54, %v464
    %vm468 = vcmp.eq.s32.totalorder %v55, %v464
    %vm469 = vcmp.eq.s32.totalorder %v56, %v464
    %vm470 = vcmp.eq.s32.totalorder %v57, %v464
    %vm471 = vcmp.eq.s32.totalorder %v58, %v464
    %v472 = vsel %vm465, 1, 0
    %v473 = vsel %vm466, 1, 0
    %v474 = vsel %vm467, 1, 0
    %v475 = vsel %vm468, 1, 0
    %v476 = vsel %vm469, 1, 0
    %v477 = vsel %vm470, 1, 0
    %v478 = vsel %vm471, 1, 0
    %v479 = vcvt.s32.f32 %v472
    %v480 = vcvt.s32.f32 %v473
    %v481 = vcvt.s32.f32 %v474
    %v482 = vcvt.s32.f32 %v475
    %v483 = vcvt.s32.f32 %v476
    %v484 = vcvt.s32.f32 %v477
    %v485 = vcvt.s32.f32 %v478
    %v487 = vsel %vm97, %v485, 0
    %489 = vmatpush.msra.mxu0 0.0
    %490 = vmatpush.msra.mxu0 0.0
    %491 = vmatpush.msra.mxu0 0.0
    %492 = vmatpush.msra.mxu0 0.0
    %493 = vmatpush.msra.mxu0 0.0
    %494 = vmatpush.msra.mxu0 0.0
    %495 = vmatpush.msra.mxu0 0.0
    %496 = vmatpush.msra.mxu0 0.0
    %497 = vmatpush.msra.mxu0 0.0
    %498 = vmatpush.msra.mxu0 %v487
    %499 = vmatpush.msra.mxu0 %v484
    %500 = vmatpush.msra.mxu0 %v483
    %501 = vmatpush.msra.mxu0 %v482
    %502 = vmatpush.msra.mxu0 %v481
    %503 = vmatpush.msra.mxu0 %v480
    %504 = vmatpush.msra.mxu0 %v479
    %505 = vmatmul.f32.gmra.mxu0 %v83
    %v506 = vpop.f32.mrf.mxu0
    %v507 = vadd.f32 0.0, %v506
    %508 = vmatmul.f32.gmra.mxu0 %v86
    %v509 = vpop.f32.mrf.mxu0
    %v510 = vadd.f32 0.0, %v509
    %511 = vmatmul.f32.gmra.mxu0 %v89
    %v512 = vpop.f32.mrf.mxu0
    %v513 = vadd.f32 0.0, %v512
    %514 = vmatmul.f32.gmra.mxu0 %v92
    %v515 = vpop.f32.mrf.mxu0
    %v516 = vadd.f32 0.0, %v515
    %517 = vmatmul.f32.gmra.mxu0 %v95
    %v518 = vpop.f32.mrf.mxu0
    %v519 = vadd.f32 0.0, %v518
    %520 = vdwg.mxu0
    %v521 = vadd.f32 %v441, %v510
    %v522 = vadd.f32 %v521, %v190
    %v523 = vmax.f32 %v522, 0.0
    %v524 = vmax.f32 %v458, %v523
    %v525 = vadd.f32 %v381, %v450
    %v526 = vadd.f32 %v525, %v519
    %v527 = vadd.f32 %v526, %v261
    %v528 = vmax.f32 %v527, 0.0
    %v529 = vmax.f32 %v463, %v528
    %v530 = vperm.slane %v42, 7
    %vm531 = vcmp.eq.s32.totalorder %v52, %v530
    %vm532 = vcmp.eq.s32.totalorder %v53, %v530
    %vm533 = vcmp.eq.s32.totalorder %v54, %v530
    %vm534 = vcmp.eq.s32.totalorder %v55, %v530
    %vm535 = vcmp.eq.s32.totalorder %v56, %v530
    %vm536 = vcmp.eq.s32.totalorder %v57, %v530
    %vm537 = vcmp.eq.s32.totalorder %v58, %v530
    %v538 = vsel %vm531, 1, 0
    %v539 = vsel %vm532, 1, 0
    %v540 = vsel %vm533, 1, 0
    %v541 = vsel %vm534, 1, 0
    %v542 = vsel %vm535, 1, 0
    %v543 = vsel %vm536, 1, 0
    %v544 = vsel %vm537, 1, 0
    %v545 = vcvt.s32.f32 %v538
    %v546 = vcvt.s32.f32 %v539
    %v547 = vcvt.s32.f32 %v540
    %v548 = vcvt.s32.f32 %v541
    %v549 = vcvt.s32.f32 %v542
    %v550 = vcvt.s32.f32 %v543
    %v551 = vcvt.s32.f32 %v544
    %v553 = vsel %vm97, %v551, 0
    %555 = vmatpush.msra.mxu0 0.0
    %556 = vmatpush.msra.mxu0 0.0
    %557 = vmatpush.msra.mxu0 0.0
    %558 = vmatpush.msra.mxu0 0.0
    %559 = vmatpush.msra.mxu0 0.0
    %560 = vmatpush.msra.mxu0 0.0
    %561 = vmatpush.msra.mxu0 0.0
    %562 = vmatpush.msra.mxu0 0.0
    %563 = vmatpush.msra.mxu0 0.0
    %564 = vmatpush.msra.mxu0 %v553
    %565 = vmatpush.msra.mxu0 %v550
    %566 = vmatpush.msra.mxu0 %v549
    %567 = vmatpush.msra.mxu0 %v548
    %568 = vmatpush.msra.mxu0 %v547
    %569 = vmatpush.msra.mxu0 %v546
    %570 = vmatpush.msra.mxu0 %v545
    %571 = vmatmul.f32.gmra.mxu0 %v83
    %v572 = vpop.f32.mrf.mxu0
    %v573 = vadd.f32 0.0, %v572
    %574 = vmatmul.f32.gmra.mxu0 %v86
    %v575 = vpop.f32.mrf.mxu0
    %v576 = vadd.f32 0.0, %v575
    %577 = vmatmul.f32.gmra.mxu0 %v89
    %v578 = vpop.f32.mrf.mxu0
    %v579 = vadd.f32 0.0, %v578
    %580 = vmatmul.f32.gmra.mxu0 %v92
    %v581 = vpop.f32.mrf.mxu0
    %v582 = vadd.f32 0.0, %v581
    %583 = vmatmul.f32.gmra.mxu0 %v95
    %v584 = vpop.f32.mrf.mxu0
    %v585 = vadd.f32 0.0, %v584
    %586 = vdwg.mxu0
    %v587 = vadd.f32 %v507, %v576
    %v588 = vadd.f32 %v587, %v190
    %v589 = vmax.f32 %v588, 0.0
    %v590 = vmax.f32 %v524, %v589
    %v591 = vadd.f32 %v447, %v516
    %v592 = vadd.f32 %v591, %v585
    %v593 = vadd.f32 %v592, %v261
    %v594 = vmax.f32 %v593, 0.0
    %v595 = vmax.f32 %v529, %v594
    %v596 = vperm.slane %v43, 0
    %vm597 = vcmp.eq.s32.totalorder %v52, %v596
    %vm598 = vcmp.eq.s32.totalorder %v53, %v596
    %vm599 = vcmp.eq.s32.totalorder %v54, %v596
    %vm600 = vcmp.eq.s32.totalorder %v55, %v596
    %vm601 = vcmp.eq.s32.totalorder %v56, %v596
    %vm602 = vcmp.eq.s32.totalorder %v57, %v596
    %vm603 = vcmp.eq.s32.totalorder %v58, %v596
    %v604 = vsel %vm597, 1, 0
    %v605 = vsel %vm598, 1, 0
    %v606 = vsel %vm599, 1, 0
    %v607 = vsel %vm600, 1, 0
    %v608 = vsel %vm601, 1, 0
    %v609 = vsel %vm602, 1, 0
    %v610 = vsel %vm603, 1, 0
    %v611 = vcvt.s32.f32 %v604
    %v612 = vcvt.s32.f32 %v605
    %v613 = vcvt.s32.f32 %v606
    %v614 = vcvt.s32.f32 %v607
    %v615 = vcvt.s32.f32 %v608
    %v616 = vcvt.s32.f32 %v609
    %v617 = vcvt.s32.f32 %v610
    %v619 = vsel %vm97, %v617, 0
    %621 = vmatpush.msra.mxu0 0.0
    %622 = vmatpush.msra.mxu0 0.0
    %623 = vmatpush.msra.mxu0 0.0
    %624 = vmatpush.msra.mxu0 0.0
    %625 = vmatpush.msra.mxu0 0.0
    %626 = vmatpush.msra.mxu0 0.0
    %627 = vmatpush.msra.mxu0 0.0
    %628 = vmatpush.msra.mxu0 0.0
    %629 = vmatpush.msra.mxu0 0.0
    %630 = vmatpush.msra.mxu0 %v619
    %631 = vmatpush.msra.mxu0 %v616
    %632 = vmatpush.msra.mxu0 %v615
    %633 = vmatpush.msra.mxu0 %v614
    %634 = vmatpush.msra.mxu0 %v613
    %635 = vmatpush.msra.mxu0 %v612
    %636 = vmatpush.msra.mxu0 %v611
    %637 = vmatmul.f32.gmra.mxu0 %v83
    %v638 = vpop.f32.mrf.mxu0
    %v639 = vadd.f32 0.0, %v638
    %640 = vmatmul.f32.gmra.mxu0 %v86
    %v641 = vpop.f32.mrf.mxu0
    %v642 = vadd.f32 0.0, %v641
    %643 = vmatmul.f32.gmra.mxu0 %v89
    %v644 = vpop.f32.mrf.mxu0
    %v645 = vadd.f32 0.0, %v644
    %646 = vmatmul.f32.gmra.mxu0 %v92
    %v647 = vpop.f32.mrf.mxu0
    %v648 = vadd.f32 0.0, %v647
    %649 = vmatmul.f32.gmra.mxu0 %v95
    %v650 = vpop.f32.mrf.mxu0
    %v651 = vadd.f32 0.0, %v650
    %652 = vdwg.mxu0
    %v653 = vadd.f32 %v573, %v642
    %v654 = vadd.f32 %v653, %v190
    %v655 = vmax.f32 %v654, 0.0
    %v656 = vmax.f32 %v590, %v655
    %v657 = vadd.f32 %v513, %v582
    %v658 = vadd.f32 %v657, %v651
    %v659 = vadd.f32 %v658, %v261
    %v660 = vmax.f32 %v659, 0.0
    %v661 = vmax.f32 %v595, %v660
    %v662 = vperm.slane %v43, 1
    %vm663 = vcmp.eq.s32.totalorder %v52, %v662
    %vm664 = vcmp.eq.s32.totalorder %v53, %v662
    %vm665 = vcmp.eq.s32.totalorder %v54, %v662
    %vm666 = vcmp.eq.s32.totalorder %v55, %v662
    %vm667 = vcmp.eq.s32.totalorder %v56, %v662
    %vm668 = vcmp.eq.s32.totalorder %v57, %v662
    %vm669 = vcmp.eq.s32.totalorder %v58, %v662
    %v670 = vsel %vm663, 1, 0
    %v671 = vsel %vm664, 1, 0
    %v672 = vsel %vm665, 1, 0
    %v673 = vsel %vm666, 1, 0
    %v674 = vsel %vm667, 1, 0
    %v675 = vsel %vm668, 1, 0
    %v676 = vsel %vm669, 1, 0
    %v677 = vcvt.s32.f32 %v670
    %v678 = vcvt.s32.f32 %v671
    %v679 = vcvt.s32.f32 %v672
    %v680 = vcvt.s32.f32 %v673
    %v681 = vcvt.s32.f32 %v674
    %v682 = vcvt.s32.f32 %v675
    %v683 = vcvt.s32.f32 %v676
    %v685 = vsel %vm97, %v683, 0
    %687 = vmatpush.msra.mxu0 0.0
    %688 = vmatpush.msra.mxu0 0.0
    %689 = vmatpush.msra.mxu0 0.0
    %690 = vmatpush.msra.mxu0 0.0
    %691 = vmatpush.msra.mxu0 0.0
    %692 = vmatpush.msra.mxu0 0.0
    %693 = vmatpush.msra.mxu0 0.0
    %694 = vmatpush.msra.mxu0 0.0
    %695 = vmatpush.msra.mxu0 0.0
    %696 = vmatpush.msra.mxu0 %v685
    %697 = vmatpush.msra.mxu0 %v682
    %698 = vmatpush.msra.mxu0 %v681
    %699 = vmatpush.msra.mxu0 %v680
    %700 = vmatpush.msra.mxu0 %v679
    %701 = vmatpush.msra.mxu0 %v678
    %702 = vmatpush.msra.mxu0 %v677
    %703 = vmatmul.f32.gmra.mxu0 %v83
    %v704 = vpop.f32.mrf.mxu0
    %v705 = vadd.f32 0.0, %v704
    %706 = vmatmul.f32.gmra.mxu0 %v86
    %v707 = vpop.f32.mrf.mxu0
    %v708 = vadd.f32 0.0, %v707
    %709 = vmatmul.f32.gmra.mxu0 %v89
    %v710 = vpop.f32.mrf.mxu0
    %v711 = vadd.f32 0.0, %v710
    %712 = vmatmul.f32.gmra.mxu0 %v92
    %v713 = vpop.f32.mrf.mxu0
    %v714 = vadd.f32 0.0, %v713
    %715 = vmatmul.f32.gmra.mxu0 %v95
    %v716 = vpop.f32.mrf.mxu0
    %v717 = vadd.f32 0.0, %v716
    %718 = vdwg.mxu0
    %v719 = vadd.f32 %v639, %v708
    %v720 = vadd.f32 %v719, %v190
    %v721 = vmax.f32 %v720, 0.0
    %v722 = vmax.f32 %v656, %v721
    %v723 = vadd.f32 %v579, %v648
    %v724 = vadd.f32 %v723, %v717
    %v725 = vadd.f32 %v724, %v261
    %v726 = vmax.f32 %v725, 0.0
    %v727 = vmax.f32 %v661, %v726
    %v728 = vperm.slane %v43, 2
    %vm729 = vcmp.eq.s32.totalorder %v52, %v728
    %vm730 = vcmp.eq.s32.totalorder %v53, %v728
    %vm731 = vcmp.eq.s32.totalorder %v54, %v728
    %vm732 = vcmp.eq.s32.totalorder %v55, %v728
    %vm733 = vcmp.eq.s32.totalorder %v56, %v728
    %vm734 = vcmp.eq.s32.totalorder %v57, %v728
    %vm735 = vcmp.eq.s32.totalorder %v58, %v728
    %v736 = vsel %vm729, 1, 0
    %v737 = vsel %vm730, 1, 0
    %v738 = vsel %vm731, 1, 0
    %v739 = vsel %vm732, 1, 0
    %v740 = vsel %vm733, 1, 0
    %v741 = vsel %vm734, 1, 0
    %v742 = vsel %vm735, 1, 0
    %v743 = vcvt.s32.f32 %v736
    %v744 = vcvt.s32.f32 %v737
    %v745 = vcvt.s32.f32 %v738
    %v746 = vcvt.s32.f32 %v739
    %v747 = vcvt.s32.f32 %v740
    %v748 = vcvt.s32.f32 %v741
    %v749 = vcvt.s32.f32 %v742
    %v751 = vsel %vm97, %v749, 0
    %753 = vmatpush.msra.mxu0 0.0
    %754 = vmatpush.msra.mxu0 0.0
    %755 = vmatpush.msra.mxu0 0.0
    %756 = vmatpush.msra.mxu0 0.0
    %757 = vmatpush.msra.mxu0 0.0
    %758 = vmatpush.msra.mxu0 0.0
    %759 = vmatpush.msra.mxu0 0.0
    %760 = vmatpush.msra.mxu0 0.0
    %761 = vmatpush.msra.mxu0 0.0
    %762 = vmatpush.msra.mxu0 %v751
    %763 = vmatpush.msra.mxu0 %v748
    %764 = vmatpush.msra.mxu0 %v747
    %765 = vmatpush.msra.mxu0 %v746
    %766 = vmatpush.msra.mxu0 %v745
    %767 = vmatpush.msra.mxu0 %v744
    %768 = vmatpush.msra.mxu0 %v743
    %769 = vmatmul.f32.gmra.mxu0 %v83
    %v770 = vpop.f32.mrf.mxu0
    %v771 = vadd.f32 0.0, %v770
    %772 = vmatmul.f32.gmra.mxu0 %v86
    %v773 = vpop.f32.mrf.mxu0
    %v774 = vadd.f32 0.0, %v773
    %775 = vmatmul.f32.gmra.mxu0 %v89
    %v776 = vpop.f32.mrf.mxu0
    %v777 = vadd.f32 0.0, %v776
    %778 = vmatmul.f32.gmra.mxu0 %v92
    %v779 = vpop.f32.mrf.mxu0
    %v780 = vadd.f32 0.0, %v779
    %781 = vmatmul.f32.gmra.mxu0 %v95
    %v782 = vpop.f32.mrf.mxu0
    %v783 = vadd.f32 0.0, %v782
    %784 = vdwg.mxu0
    %v785 = vadd.f32 %v705, %v774
    %v786 = vadd.f32 %v785, %v190
    %v787 = vmax.f32 %v786, 0.0
    %v788 = vmax.f32 %v722, %v787
    %v789 = vadd.f32 %v645, %v714
    %v790 = vadd.f32 %v789, %v783
    %v791 = vadd.f32 %v790, %v261
    %v792 = vmax.f32 %v791, 0.0
    %v793 = vmax.f32 %v727, %v792
    %v794 = vperm.slane %v43, 3
    %vm795 = vcmp.eq.s32.totalorder %v52, %v794
    %vm796 = vcmp.eq.s32.totalorder %v53, %v794
    %vm797 = vcmp.eq.s32.totalorder %v54, %v794
    %vm798 = vcmp.eq.s32.totalorder %v55, %v794
    %vm799 = vcmp.eq.s32.totalorder %v56, %v794
    %vm800 = vcmp.eq.s32.totalorder %v57, %v794
    %vm801 = vcmp.eq.s32.totalorder %v58, %v794
    %v802 = vsel %vm795, 1, 0
    %v803 = vsel %vm796, 1, 0
    %v804 = vsel %vm797, 1, 0
    %v805 = vsel %vm798, 1, 0
    %v806 = vsel %vm799, 1, 0
    %v807 = vsel %vm800, 1, 0
    %v808 = vsel %vm801, 1, 0
    %v809 = vcvt.s32.f32 %v802
    %v810 = vcvt.s32.f32 %v803
    %v811 = vcvt.s32.f32 %v804
    %v812 = vcvt.s32.f32 %v805
    %v813 = vcvt.s32.f32 %v806
    %v814 = vcvt.s32.f32 %v807
    %v815 = vcvt.s32.f32 %v808
    %v817 = vsel %vm97, %v815, 0
    %819 = vmatpush.msra.mxu0 0.0
    %820 = vmatpush.msra.mxu0 0.0
    %821 = vmatpush.msra.mxu0 0.0
    %822 = vmatpush.msra.mxu0 0.0
    %823 = vmatpush.msra.mxu0 0.0
    %824 = vmatpush.msra.mxu0 0.0
    %825 = vmatpush.msra.mxu0 0.0
    %826 = vmatpush.msra.mxu0 0.0
    %827 = vmatpush.msra.mxu0 0.0
    %828 = vmatpush.msra.mxu0 %v817
    %829 = vmatpush.msra.mxu0 %v814
    %830 = vmatpush.msra.mxu0 %v813
    %831 = vmatpush.msra.mxu0 %v812
    %832 = vmatpush.msra.mxu0 %v811
    %833 = vmatpush.msra.mxu0 %v810
    %834 = vmatpush.msra.mxu0 %v809
    %835 = vmatmul.f32.gmra.mxu0 %v83
    %v836 = vpop.f32.mrf.mxu0
    %v837 = vadd.f32 0.0, %v836
    %838 = vmatmul.f32.gmra.mxu0 %v86
    %v839 = vpop.f32.mrf.mxu0
    %v840 = vadd.f32 0.0, %v839
    %841 = vmatmul.f32.gmra.mxu0 %v89
    %v842 = vpop.f32.mrf.mxu0
    %v843 = vadd.f32 0.0, %v842
    %844 = vmatmul.f32.gmra.mxu0 %v92
    %v845 = vpop.f32.mrf.mxu0
    %v846 = vadd.f32 0.0, %v845
    %847 = vmatmul.f32.gmra.mxu0 %v95
    %v848 = vpop.f32.mrf.mxu0
    %v849 = vadd.f32 0.0, %v848
    %850 = vdwg.mxu0
    %v851 = vadd.f32 %v771, %v840
    %v852 = vadd.f32 %v851, %v190
    %v853 = vmax.f32 %v852, 0.0
    %v854 = vmax.f32 %v788, %v853
    %v855 = vadd.f32 %v711, %v780
    %v856 = vadd.f32 %v855, %v849
    %v857 = vadd.f32 %v856, %v261
    %v858 = vmax.f32 %v857, 0.0
    %v859 = vmax.f32 %v793, %v858
    %v860 = vperm.slane %v43, 4
    %vm861 = vcmp.eq.s32.totalorder %v52, %v860
    %vm862 = vcmp.eq.s32.totalorder %v53, %v860
    %vm863 = vcmp.eq.s32.totalorder %v54, %v860
    %vm864 = vcmp.eq.s32.totalorder %v55, %v860
    %vm865 = vcmp.eq.s32.totalorder %v56, %v860
    %vm866 = vcmp.eq.s32.totalorder %v57, %v860
    %vm867 = vcmp.eq.s32.totalorder %v58, %v860
    %v868 = vsel %vm861, 1, 0
    %v869 = vsel %vm862, 1, 0
    %v870 = vsel %vm863, 1, 0
    %v871 = vsel %vm864, 1, 0
    %v872 = vsel %vm865, 1, 0
    %v873 = vsel %vm866, 1, 0
    %v874 = vsel %vm867, 1, 0
    %v875 = vcvt.s32.f32 %v868
    %v876 = vcvt.s32.f32 %v869
    %v877 = vcvt.s32.f32 %v870
    %v878 = vcvt.s32.f32 %v871
    %v879 = vcvt.s32.f32 %v872
    %v880 = vcvt.s32.f32 %v873
    %v881 = vcvt.s32.f32 %v874
    %v883 = vsel %vm97, %v881, 0
    %885 = vmatpush.msra.mxu0 0.0
    %886 = vmatpush.msra.mxu0 0.0
    %887 = vmatpush.msra.mxu0 0.0
    %888 = vmatpush.msra.mxu0 0.0
    %889 = vmatpush.msra.mxu0 0.0
    %890 = vmatpush.msra.mxu0 0.0
    %891 = vmatpush.msra.mxu0 0.0
    %892 = vmatpush.msra.mxu0 0.0
    %893 = vmatpush.msra.mxu0 0.0
    %894 = vmatpush.msra.mxu0 %v883
    %895 = vmatpush.msra.mxu0 %v880
    %896 = vmatpush.msra.mxu0 %v879
    %897 = vmatpush.msra.mxu0 %v878
    %898 = vmatpush.msra.mxu0 %v877
    %899 = vmatpush.msra.mxu0 %v876
    %900 = vmatpush.msra.mxu0 %v875
    %901 = vmatmul.f32.gmra.mxu0 %v83
    %v902 = vpop.f32.mrf.mxu0
    %v903 = vadd.f32 0.0, %v902
    %904 = vmatmul.f32.gmra.mxu0 %v86
    %v905 = vpop.f32.mrf.mxu0
    %v906 = vadd.f32 0.0, %v905
    %907 = vmatmul.f32.gmra.mxu0 %v89
    %v908 = vpop.f32.mrf.mxu0
    %v909 = vadd.f32 0.0, %v908
    %910 = vmatmul.f32.gmra.mxu0 %v92
    %v911 = vpop.f32.mrf.mxu0
    %v912 = vadd.f32 0.0, %v911
    %913 = vmatmul.f32.gmra.mxu0 %v95
    %v914 = vpop.f32.mrf.mxu0
    %v915 = vadd.f32 0.0, %v914
    %916 = vdwg.mxu0
    %v917 = vadd.f32 %v837, %v906
    %v918 = vadd.f32 %v917, %v190
    %v919 = vmax.f32 %v918, 0.0
    %v920 = vmax.f32 %v854, %v919
    %v921 = vadd.f32 %v777, %v846
    %v922 = vadd.f32 %v921, %v915
    %v923 = vadd.f32 %v922, %v261
    %v924 = vmax.f32 %v923, 0.0
    %v925 = vmax.f32 %v859, %v924
    %v926 = vperm.slane %v43, 5
    %vm927 = vcmp.eq.s32.totalorder %v52, %v926
    %vm928 = vcmp.eq.s32.totalorder %v53, %v926
    %vm929 = vcmp.eq.s32.totalorder %v54, %v926
    %vm930 = vcmp.eq.s32.totalorder %v55, %v926
    %vm931 = vcmp.eq.s32.totalorder %v56, %v926
    %vm932 = vcmp.eq.s32.totalorder %v57, %v926
    %vm933 = vcmp.eq.s32.totalorder %v58, %v926
    %v934 = vsel %vm927, 1, 0
    %v935 = vsel %vm928, 1, 0
    %v936 = vsel %vm929, 1, 0
    %v937 = vsel %vm930, 1, 0
    %v938 = vsel %vm931, 1, 0
    %v939 = vsel %vm932, 1, 0
    %v940 = vsel %vm933, 1, 0
    %v941 = vcvt.s32.f32 %v934
    %v942 = vcvt.s32.f32 %v935
    %v943 = vcvt.s32.f32 %v936
    %v944 = vcvt.s32.f32 %v937
    %v945 = vcvt.s32.f32 %v938
    %v946 = vcvt.s32.f32 %v939
    %v947 = vcvt.s32.f32 %v940
    %v949 = vsel %vm97, %v947, 0
    %951 = vmatpush.msra.mxu0 0.0
    %952 = vmatpush.msra.mxu0 0.0
    %953 = vmatpush.msra.mxu0 0.0
    %954 = vmatpush.msra.mxu0 0.0
    %955 = vmatpush.msra.mxu0 0.0
    %956 = vmatpush.msra.mxu0 0.0
    %957 = vmatpush.msra.mxu0 0.0
    %958 = vmatpush.msra.mxu0 0.0
    %959 = vmatpush.msra.mxu0 0.0
    %960 = vmatpush.msra.mxu0 %v949
    %961 = vmatpush.msra.mxu0 %v946
    %962 = vmatpush.msra.mxu0 %v945
    %963 = vmatpush.msra.mxu0 %v944
    %964 = vmatpush.msra.mxu0 %v943
    %965 = vmatpush.msra.mxu0 %v942
    %966 = vmatpush.msra.mxu0 %v941
    %967 = vmatmul.f32.gmra.mxu0 %v83
    %v968 = vpop.f32.mrf.mxu0
    %v969 = vadd.f32 0.0, %v968
    %970 = vmatmul.f32.gmra.mxu0 %v86
    %v971 = vpop.f32.mrf.mxu0
    %v972 = vadd.f32 0.0, %v971
    %973 = vmatmul.f32.gmra.mxu0 %v89
    %v974 = vpop.f32.mrf.mxu0
    %v975 = vadd.f32 0.0, %v974
    %976 = vmatmul.f32.gmra.mxu0 %v92
    %v977 = vpop.f32.mrf.mxu0
    %v978 = vadd.f32 0.0, %v977
    %979 = vmatmul.f32.gmra.mxu0 %v95
    %v980 = vpop.f32.mrf.mxu0
    %v981 = vadd.f32 0.0, %v980
    %982 = vdwg.mxu0
    %v983 = vadd.f32 %v903, %v972
    %v984 = vadd.f32 %v983, %v190
    %v985 = vmax.f32 %v984, 0.0
    %v986 = vmax.f32 %v920, %v985
    %v987 = vadd.f32 %v843, %v912
    %v988 = vadd.f32 %v987, %v981
    %v989 = vadd.f32 %v988, %v261
    %v990 = vmax.f32 %v989, 0.0
    %v991 = vmax.f32 %v925, %v990
    %v992 = vperm.slane %v43, 6
    %vm993 = vcmp.eq.s32.totalorder %v52, %v992
    %vm994 = vcmp.eq.s32.totalorder %v53, %v992
    %vm995 = vcmp.eq.s32.totalorder %v54, %v992
    %vm996 = vcmp.eq.s32.totalorder %v55, %v992
    %vm997 = vcmp.eq.s32.totalorder %v56, %v992
    %vm998 = vcmp.eq.s32.totalorder %v57, %v992
    %vm999 = vcmp.eq.s32.totalorder %v58, %v992
    %v1000 = vsel %vm993, 1, 0
    %v1001 = vsel %vm994, 1, 0
    %v1002 = vsel %vm995, 1, 0
    %v1003 = vsel %vm996, 1, 0
    %v1004 = vsel %vm997, 1, 0
    %v1005 = vsel %vm998, 1, 0
    %v1006 = vsel %vm999, 1, 0
    %v1007 = vcvt.s32.f32 %v1000
    %v1008 = vcvt.s32.f32 %v1001
    %v1009 = vcvt.s32.f32 %v1002
    %v1010 = vcvt.s32.f32 %v1003
    %v1011 = vcvt.s32.f32 %v1004
    %v1012 = vcvt.s32.f32 %v1005
    %v1013 = vcvt.s32.f32 %v1006
    %v1015 = vsel %vm97, %v1013, 0
    %1017 = vmatpush.msra.mxu0 0.0
    %1018 = vmatpush.msra.mxu0 0.0
    %1019 = vmatpush.msra.mxu0 0.0
    %1020 = vmatpush.msra.mxu0 0.0
    %1021 = vmatpush.msra.mxu0 0.0
    %1022 = vmatpush.msra.mxu0 0.0
    %1023 = vmatpush.msra.mxu0 0.0
    %1024 = vmatpush.msra.mxu0 0.0
    %1025 = vmatpush.msra.mxu0 0.0
    %1026 = vmatpush.msra.mxu0 %v1015
    %1027 = vmatpush.msra.mxu0 %v1012
    %1028 = vmatpush.msra.mxu0 %v1011
    %1029 = vmatpush.msra.mxu0 %v1010
    %1030 = vmatpush.msra.mxu0 %v1009
    %1031 = vmatpush.msra.mxu0 %v1008
    %1032 = vmatpush.msra.mxu0 %v1007
    %1033 = vmatmul.f32.gmra.mxu0 %v83
    %v1034 = vpop.f32.mrf.mxu0
    %v1035 = vadd.f32 0.0, %v1034
    %1036 = vmatmul.f32.gmra.mxu0 %v86
    %v1037 = vpop.f32.mrf.mxu0
    %v1038 = vadd.f32 0.0, %v1037
    %1039 = vmatmul.f32.gmra.mxu0 %v89
    %v1040 = vpop.f32.mrf.mxu0
    %1041 = vmatmul.f32.gmra.mxu0 %v92
    %v1042 = vpop.f32.mrf.mxu0
    %v1043 = vadd.f32 0.0, %v1042
    %1044 = vmatmul.f32.gmra.mxu0 %v95
    %v1045 = vpop.f32.mrf.mxu0
    %v1046 = vadd.f32 0.0, %v1045
    %1047 = vdwg.mxu0
    %v1048 = vadd.f32 %v969, %v1038
    %v1049 = vadd.f32 %v1048, %v190
    %v1050 = vmax.f32 %v1049, 0.0
    %v1051 = vmax.f32 %v986, %v1050
    %v1052 = vadd.f32 %v909, %v978
    %v1053 = vadd.f32 %v1052, %v1046
    %v1054 = vadd.f32 %v1053, %v261
    %v1055 = vmax.f32 %v1054, 0.0
    %v1056 = vmax.f32 %v991, %v1055
    %v1057 = vperm.slane %v43, 7
    %vm1058 = vcmp.eq.s32.totalorder %v52, %v1057
    %vm1059 = vcmp.eq.s32.totalorder %v53, %v1057
    %vm1060 = vcmp.eq.s32.totalorder %v54, %v1057
    %vm1061 = vcmp.eq.s32.totalorder %v55, %v1057
    %vm1062 = vcmp.eq.s32.totalorder %v56, %v1057
    %vm1063 = vcmp.eq.s32.totalorder %v57, %v1057
    %vm1064 = vcmp.eq.s32.totalorder %v58, %v1057
    %v1065 = vsel %vm1058, 1, 0
    %v1066 = vsel %vm1059, 1, 0
    %v1067 = vsel %vm1060, 1, 0
    %v1068 = vsel %vm1061, 1, 0
    %v1069 = vsel %vm1062, 1, 0
    %v1070 = vsel %vm1063, 1, 0
    %v1071 = vsel %vm1064, 1, 0
    %v1072 = vcvt.s32.f32 %v1065
    %v1073 = vcvt.s32.f32 %v1066
    %v1074 = vcvt.s32.f32 %v1067
    %v1075 = vcvt.s32.f32 %v1068
    %v1076 = vcvt.s32.f32 %v1069
    %v1077 = vcvt.s32.f32 %v1070
    %v1078 = vcvt.s32.f32 %v1071
    %v1080 = vsel %vm97, %v1078, 0
    %1082 = vmatpush.msra.mxu0 0.0
    %1083 = vmatpush.msra.mxu0 0.0
    %1084 = vmatpush.msra.mxu0 0.0
    %1085 = vmatpush.msra.mxu0 0.0
    %1086 = vmatpush.msra.mxu0 0.0
    %1087 = vmatpush.msra.mxu0 0.0
    %1088 = vmatpush.msra.mxu0 0.0
    %1089 = vmatpush.msra.mxu0 0.0
    %1090 = vmatpush.msra.mxu0 0.0
    %1091 = vmatpush.msra.mxu0 %v1080
    %1092 = vmatpush.msra.mxu0 %v1077
    %1093 = vmatpush.msra.mxu0 %v1076
    %1094 = vmatpush.msra.mxu0 %v1075
    %1095 = vmatpush.msra.mxu0 %v1074
    %1096 = vmatpush.msra.mxu0 %v1073
    %1097 = vmatpush.msra.mxu0 %v1072
    %1098 = vmatmul.f32.gmra.mxu0 %v83
    %v1099 = vpop.f32.mrf.mxu0
    %1100 = vmatmul.f32.gmra.mxu0 %v86
    %v1101 = vpop.f32.mrf.mxu0
    %v1102 = vadd.f32 0.0, %v1101
    %1103 = vmatmul.f32.gmra.mxu0 %v89
    %v1104 = vpop.f32.mrf.mxu0
    %1105 = vmatmul.f32.gmra.mxu0 %v92
    %v1106 = vpop.f32.mrf.mxu0
    %1107 = vmatmul.f32.gmra.mxu0 %v95
    %v1108 = vpop.f32.mrf.mxu0
    %v1109 = vadd.f32 0.0, %v1108
    %1110 = vdwg.mxu0
    %v1111 = vadd.f32 %v1035, %v1102
    %v1112 = vadd.f32 %v1111, %v190
    %v1113 = vmax.f32 %v1112, 0.0
    %v1114 = vmax.f32 %v1051, %v1113
    %v1115 = vadd.f32 %v975, %v1043
    %v1116 = vadd.f32 %v1115, %v1109
    %v1117 = vadd.f32 %v1116, %v261
    %v1118 = vmax.f32 %v1117, 0.0
    %v1119 = vmax.f32 %v1056, %v1118
    %v1120 = vld [vmem:[%s4] sm:$0xf]
    %v1121 = vld [vmem:[%s5] sm:$0xf]
    %vm1122 = vcmask 64512
    %v1124 = vsel %vm1122, %v1121, 0
    %1126 = vmatpush.msra.mxu0 0.0
    %1127 = vmatpush.msra.mxu0 0.0
    %1128 = vmatpush.msra.mxu0 0.0
    %1129 = vmatpush.msra.mxu0 0.0
    %1130 = vmatpush.msra.mxu0 0.0
    %1131 = vmatpush.msra.mxu0 0.0
    %1132 = vmatpush.msra.mxu0 0.0
    %1133 = vmatpush.msra.mxu0 0.0
    %1134 = vmatpush.msra.mxu0 0.0
    %1135 = vmatpush.msra.mxu0 0.0
    %1136 = vmatpush.msra.mxu0 0.0
    %1137 = vmatpush.msra.mxu0 0.0
    %1138 = vmatpush.msra.mxu0 0.0
    %1139 = vmatpush.msra.mxu0 0.0
    %1140 = vmatpush.msra.mxu0 0.0
    %1141 = vmatpush.msra.mxu0 %v1119
    %1142 = vmatmul.f32.gmra.mxu0 %v1124
    %v1143 = vpop.f32.mrf.mxu0
    %v1144 = vadd.f32 0.0, %v1143
    %1145 = vdwg.mxu0
    %v1147 = vsel %vm1122, %v1120, 0
    %1149 = vmatpush.msra.mxu0 0.0
    %1150 = vmatpush.msra.mxu0 0.0
    %1151 = vmatpush.msra.mxu0 0.0
    %1152 = vmatpush.msra.mxu0 0.0
    %1153 = vmatpush.msra.mxu0 0.0
    %1154 = vmatpush.msra.mxu0 0.0
    %1155 = vmatpush.msra.mxu0 0.0
    %1156 = vmatpush.msra.mxu0 0.0
    %1157 = vmatpush.msra.mxu0 0.0
    %1158 = vmatpush.msra.mxu0 0.0
    %1159 = vmatpush.msra.mxu0 0.0
    %1160 = vmatpush.msra.mxu0 0.0
    %1161 = vmatpush.msra.mxu0 0.0
    %1162 = vmatpush.msra.mxu0 0.0
    %1163 = vmatpush.msra.mxu0 0.0
    %1164 = vmatpush.msra.mxu0 %v1114
    %1165 = vmatmul.f32.gmra.mxu0 %v1147
    %v1166 = vpop.f32.mrf.mxu0
    %v1167 = vadd.f32 %v1144, %v1166
    %1168 = vdwg.mxu0
    %v1169 = vld [vmem:[%s6] sm:$0xf]
    %1171 = vset.pattern.permute.xlu0 0
    %1172 = vperm.xlu0 %1171, %v1169
    %v1173 = vpop.permute.xlu0 %1172
    %v1175 = vadd.f32 %v1167, %v1173
    %vm1176 = vcmask 11264
    %1177 = vst.msk [vmem:[%s7] sm:$0xf] %vm1176, %v1175
    // Predicated region
    $region34: #{tpu_custom_call.1} parent=1 // pred_check
      _
    $region35: #{tpu_custom_call.1} parent=1 // pred_check_branch
      %1179 = sbr.rel (0) target = $region37
    $region36: #{tpu_custom_call.1} parent=1 // pred_region
      _
    $region37: #{tpu_custom_call.1} parent=1 // pred_fallthru
      _
    // Predicated region
    $region38: #{tpu_custom_call.1} parent=1 // pred_check
      _
    $region39: #{tpu_custom_call.1} parent=1 // pred_check_branch
      %1181 = sbr.rel (0) target = $region41
    $region40: #{tpu_custom_call.1} parent=1 // pred_region
      _
    $region41: #{tpu_custom_call.1} parent=1 // pred_fallthru
      _
    %1182 = vsyncpa [#allocation3], 1

</llo_original>
